<compile_context>
chip_gen: v6e
topology: v6e:2x2x1
jax: 0.10.0
libtpu: 0.0.40
codegen_flags: <defaults>
</compile_context>

<pallas_src>
import functools

import jax
import jax.numpy as jnp
from jax.experimental import pallas as pl
from jax.experimental.pallas import tpu as pltpu


def _round_up(n, m):
    return ((n + m - 1) // m) * m


# ----------------------------------------------------------------------------
# Parameter slab layout: every folded parameter lives at an 8-aligned row
# start, column 0, inside one (rows, 128) f32 slab.
# ----------------------------------------------------------------------------
def _slab_layout(D, H, W):
    entries = [
        ("watt",   D,     D),      # global_attention weight, (out, in)
        ("expand", D * W, D),      # 0/1 expansion matrix, rows scaled by 1/scale
        ("w1x",    H,     D),      # feature_net weight (x part), BN folded
        ("w1red",  H,     D * W),  # (feature_net wavelet part) @ reduce, BN folded
        ("wra",    H,     H),      # res_block Linear #1, BN folded
        ("wocat",  1,     2 * H),  # [Wout^T | (Wrb_f @ Wout)^T]
        ("batt",   D,     1),      # attention bias
        ("shift",  D * W, 1),      # shifts * (1/scale)
        ("b1",     H,     1),      # feature_net bias, BN folded
        ("bra",    H,     1),      # res_block #1 bias, BN folded
        ("bo",     1,     1),      # folded head bias
    ]
    layout, r = {}, 0
    for name, nr, nc in entries:
        layout[name] = (r, nr, nc)
        r = _round_up(r + nr, 8)
    nrows = _round_up(r, 8)
    ncols = _round_up(max(nc for (_, _, nc) in entries), 128)
    return layout, nrows, ncols


# ----------------------------------------------------------------------------
# Pallas kernel: whole MS_PINN forward for one batch tile (feature-major).
# ----------------------------------------------------------------------------
def _ms_pinn_kernel(x_ref, slab_ref, o_ref, *, layout):
    f32 = jnp.float32

    def par(name):                       # static slice of the parameter slab
        r0, nr, nc = layout[name]
        return slab_ref[r0:r0 + nr, 0:nc]

    xt = x_ref[...]                                               # (D, TB)

    # ---- global attention: sigmoid(W @ x + b) * x ---------------------------
    att = jax.nn.sigmoid(
        jnp.dot(par("watt"), xt, preferred_element_type=f32) + par("batt"))
    xw = xt * att                                                 # (D, TB)

    # ---- WaveletLayer (Mexican hat), lane-dense ------------------------------
    # s[d*W+w, :] = (xw[d,:] - shifts[d,w]) / (scales[w] + 1e-8); the 1/scale
    # factor is folded into the expansion matrix and the shift slab-side.
    s = jnp.dot(par("expand"), xw, preferred_element_type=f32) - par("shift")
    s2 = s * s
    wav = (1.0 - s2) * jnp.exp(-0.5 * s2)                         # (D*W, TB)

    # ---- feature_net (concat + Linear + BN folded + LeakyReLU(0.1)) ----------
    # The wavelet "reduce" matmul is pre-folded into w1red, so the wavelet
    # contribution is a single dot and the xw contribution is an independent
    # (off-critical-path) dot.
    h1 = (jnp.dot(par("w1x"), xw, preferred_element_type=f32)
          + jnp.dot(par("w1red"), wav, preferred_element_type=f32)
          + par("b1"))
    h1 = jnp.where(h1 > 0, h1, 0.1 * h1)                          # (H, TB)
    # Dropout(0.1): identity in inference mode.

    # ---- res_block Linear #1 + LeakyReLU (Linear #2 folded into head) --------
    ra = jnp.dot(par("wra"), h1, preferred_element_type=f32) + par("bra")
    ra = jnp.where(ra > 0, ra, 0.1 * ra)                          # (H, TB)

    # ---- fused output head + clamp(min=0) ------------------------------------
    hr = jnp.concatenate([h1, ra], axis=0)                        # (2H, TB)
    out = jnp.dot(par("wocat"), hr, preferred_element_type=f32) + par("bo")
    o_ref[...] = jnp.maximum(out, 0.0)                            # (1, TB)


# ----------------------------------------------------------------------------
# Parameter setup (raw PyTorch-like params) + slab preparation.
# ----------------------------------------------------------------------------
def init_params(key, input_dim, hidden_dim=128, n_wavelets=12):
    """Deterministic synthetic parameters matching the PyTorch module shapes.
    Linear weights are stored (in, out), biases (out,)."""
    D, H, W = input_dim, hidden_dim, n_wavelets
    ks = jax.random.split(key, 8)

    def linear(k, fan_in, fan_out):
        kw, kb = jax.random.split(k)
        bound = 1.0 / jnp.sqrt(jnp.float32(fan_in))
        w = jax.random.uniform(kw, (fan_in, fan_out), jnp.float32, -bound, bound)
        b = jax.random.uniform(kb, (fan_out,), jnp.float32, -bound, bound)
        return w, b

    W_att, b_att = linear(ks[0], D, D)
    scales = jax.random.uniform(ks[1], (W,), jnp.float32) * 0.5 + 0.5
    shifts = jax.random.normal(ks[2], (D, W), jnp.float32)
    wwts = jax.random.normal(ks[3], (D, W), jnp.float32) * 0.1
    W1, b1 = linear(ks[4], D + W, H)
    Wra, bra = linear(ks[5], H, H)
    Wrb, brb = linear(ks[6], H, H)
    Wout, bout = linear(ks[7], H, 1)
    return dict(W_att=W_att, b_att=b_att, scales=scales, shifts=shifts,
                wwts=wwts, W1=W1, b1=b1, Wra=Wra, bra=bra, Wrb=Wrb,
                brb=brb, Wout=Wout, bout=bout)


def prepare_kernel_params(p, input_dim, hidden_dim, n_wavelets):
    """Transpose / fold / densify raw parameters into one f32 slab.
    Valid for inference mode only (BN eval stats, Dropout identity)."""
    D, H, W = input_dim, hidden_dim, n_wavelets
    layout, nrows, ncols = _slab_layout(D, H, W)
    # BatchNorm1d eval with fresh stats: y = x / sqrt(1 + eps)
    bn = 1.0 / jnp.sqrt(jnp.float32(1.0 + 1e-5))

    # Wavelet densification with scales folded in.
    inv_scales = 1.0 / (p["scales"] + 1e-8)                          # (W,)
    invsc_flat = jnp.tile(inv_scales, (D,))                          # (D*W,)
    expand_scaled = (jnp.repeat(jnp.eye(D, dtype=jnp.float32), W, axis=0)
                     * invsc_flat[:, None])                          # (D*W, D)
    shift_scaled = (p["shifts"] * inv_scales[None, :]).reshape(D * W, 1)

    # feature_net Linear with BN folded; reduce matmul folded into w1w.
    W1f, b1f = p["W1"] * bn, p["b1"] * bn
    w1x_t = W1f[:D].T                                                # (H, D)
    w1w_t = W1f[D:].T                                                # (H, W)
    reduce_t = (jnp.eye(W, dtype=jnp.float32)[:, None, :]
                * p["wwts"][None, :, :]).reshape(W, D * W)           # (W, D*W)
    w1red = w1w_t @ reduce_t                                         # (H, D*W)

    # res_block Linear #1 with BN folded.
    Wraf, braf = p["Wra"] * bn, p["bra"] * bn
    # res_block Linear #2 (BN folded) folded into the output head.
    Wrbf, brbf = p["Wrb"] * bn, p["brb"] * bn
    wocat = jnp.concatenate([p["Wout"].T, (Wrbf @ p["Wout"]).T], axis=1)  # (1,2H)
    bo = (brbf @ p["Wout"] + p["bout"]).reshape(1, 1)

    vals = {
        "watt": p["W_att"].T,
        "expand": expand_scaled,
        "w1x": w1x_t,
        "w1red": w1red,
        "wra": Wraf.T,
        "wocat": wocat,
        "batt": p["b_att"].reshape(D, 1),
        "shift": shift_scaled,
        "b1": b1f.reshape(H, 1),
        "bra": braf.reshape(H, 1),
        "bo": bo,
    }
    slab = jnp.zeros((nrows, ncols), jnp.float32)
    for name, (r0, nr, nc) in layout.items():
        slab = slab.at[r0:r0 + nr, 0:nc].set(vals[name].astype(jnp.float32))
    return slab


# ----------------------------------------------------------------------------
# Wrapper: transpose+pad batch, pallas_call plumbing.
# ----------------------------------------------------------------------------
@functools.partial(jax.jit, static_argnames=("dims", "block_b"))
def ms_pinn_forward(x, slab, dims, block_b=512):
    D, H, W = dims
    layout, nrows, ncols = _slab_layout(D, H, W)
    assert slab.shape == (nrows, ncols)
    B = x.shape[0]
    assert x.shape[1] == D
    assert block_b % 128 == 0, "batch tile must be a multiple of 128 (lane width)"

    # Shrink the tile when B is small so padding waste stays bounded.
    tb = min(block_b, _round_up(B, 128))
    b_pad = _round_up(B, tb)
    grid = (b_pad // tb,)

    # Feature-major, batch-minor; single fused transpose+pad (batch padding
    # forces a materialization anyway; ~24 B/row, negligible here).
    xt = jnp.pad(x.T.astype(jnp.float32), ((0, 0), (0, b_pad - B)))

    out_t = pl.pallas_call(
        functools.partial(_ms_pinn_kernel, layout=layout),
        grid=grid,
        in_specs=[
            pl.BlockSpec((D, tb), lambda i: (0, i)),          # input tile
            pl.BlockSpec((nrows, ncols), lambda i: (0, 0)),   # parameter slab
        ],
        out_specs=pl.BlockSpec((1, tb), lambda i: (0, i)),
        out_shape=jax.ShapeDtypeStruct((1, b_pad), jnp.float32),
        compiler_params=pltpu.CompilerParams(
            dimension_semantics=("parallel",),                 # v7x: 2 TCs share grid
            vmem_limit_bytes=32 * 1024 * 1024),                # v5e scoped-VMEM headroom
    )(xt, slab)

    return out_t[0, :B][:, None]                               # (B, 1)


# ----------------------------------------------------------------------------
# Pure-JAX reference faithful to the PyTorch forward (eval mode).
# ----------------------------------------------------------------------------
def ms_pinn_reference(x, p):
    hp = jax.lax.Precision.HIGHEST
    bn = 1.0 / jnp.sqrt(jnp.float32(1.0 + 1e-5))
    att = jax.nn.sigmoid(jnp.dot(x, p["W_att"], precision=hp) + p["b_att"])
    xw = x * att
    s = (xw[:, :, None] - p["shifts"][None, :, :]) / (p["scales"][None, None, :] + 1e-8)
    s2 = s * s
    wav = (1.0 - s2) * jnp.exp(-0.5 * s2)
    wfeat = jnp.sum(wav * p["wwts"][None, :, :], axis=1)
    comb = jnp.concatenate([xw, wfeat], axis=1)
    h1 = (jnp.dot(comb, p["W1"], precision=hp) + p["b1"]) * bn
    h1 = jnp.where(h1 > 0, h1, 0.1 * h1)
    ra = (jnp.dot(h1, p["Wra"], precision=hp) + p["bra"]) * bn
    ra = jnp.where(ra > 0, ra, 0.1 * ra)
    rb = (jnp.dot(ra, p["Wrb"], precision=hp) + p["brb"]) * bn
    feat = h1 + rb
    out = jnp.dot(feat, p["Wout"], precision=hp) + p["bout"]
    return jnp.maximum(out, 0.0)


if __name__ == "__main__":
    # Small tabular shapes consistent with the module: (B, input_dim) input.
    # B=1024 with a 512-column batch tile -> grid of 2 parallel steps.
    B, INPUT_DIM, HIDDEN_DIM, N_WAVELETS = 1024, 6, 32, 12
    BLOCK_B = 512

    key = jax.random.PRNGKey(0)
    k_param, k_x = jax.random.split(key)
    raw = init_params(k_param, INPUT_DIM, HIDDEN_DIM, N_WAVELETS)
    slab = prepare_kernel_params(raw, INPUT_DIM, HIDDEN_DIM, N_WAVELETS)
    x = jax.random.normal(k_x, (B, INPUT_DIM), dtype=jnp.float32)

    out = ms_pinn_forward(x, slab, dims=(INPUT_DIM, HIDDEN_DIM, N_WAVELETS),
                          block_b=BLOCK_B)
    out = jax.block_until_ready(out)

    ref = ms_pinn_reference(x, raw)
    assert out.shape == (B, 1)
    max_err = float(jnp.max(jnp.abs(out - ref)))
    assert jnp.allclose(out, ref, rtol=2e-3, atol=2e-3), max_err

    print("KERNEL_OK")
</pallas_src>

<mosaic_0001>
module attributes {stable_mosaic.version = 11 : i64} {
  func.func @_ms_pinn_kernel(%arg0: i32, %arg1: memref<6x512xf32, #tpu.memory_space<vmem>>, %arg2: memref<336x128xf32, #tpu.memory_space<vmem>>, %arg3: memref<1x512xf32, #tpu.memory_space<vmem>>) attributes {dimension_semantics = [#tpu.dimension_semantics<parallel>], iteration_bounds = array<i64: 2>, scalar_prefetch = 0 : i64, scratch_operands = 0 : i64, tpu.core_type = #tpu.core_type<tc>, window_params = [{transform_indices = @transform_0, window_bounds = array<i64: 6, 512>}, {pipeline_mode = #tpu.pipeline_mode<synchronous>, transform_indices = @transform_1, window_bounds = array<i64: 336, 128>}, {transform_indices = @transform_2, window_bounds = array<i64: 1, 512>}]} {
    %c0 = arith.constant 0 : index
    %c0_0 = arith.constant 0 : index
    %0 = vector.load %arg1[%c0, %c0_0] : memref<6x512xf32, #tpu.memory_space<vmem>>, vector<6x512xf32>
    %c0_1 = arith.constant 0 : index
    %c0_2 = arith.constant 0 : index
    %1 = vector.load %arg2[%c0_1, %c0_2] : memref<336x128xf32, #tpu.memory_space<vmem>>, vector<6x6xf32>
    %cst = arith.constant dense<0.000000e+00> : vector<6x512xf32>
    %2 = tpu.matmul %1, %0, %cst {dimension_numbers = #tpu.dot_dimension_numbers<[1], [0], [0], [1], [0, 0, 1, 1], [], []>} : vector<6x6xf32>, vector<6x512xf32>, vector<6x512xf32> -> vector<6x512xf32>
    %c184 = arith.constant 184 : index
    %c0_3 = arith.constant 0 : index
    %3 = vector.load %arg2[%c184, %c0_3] : memref<336x128xf32, #tpu.memory_space<vmem>>, vector<6x1xf32>
    %4 = vector.broadcast %3 : vector<6x1xf32> to vector<6x512xf32>
    %5 = arith.addf %2, %4 : vector<6x512xf32>
    %6 = arith.negf %5 : vector<6x512xf32>
    %7 = math.exp %6 : vector<6x512xf32>
    %cst_4 = arith.constant 1.000000e+00 : f32
    %8 = vector.broadcast %cst_4 : f32 to vector<6x512xf32>
    %9 = arith.addf %8, %7 : vector<6x512xf32>
    %10 = arith.divf %8, %9 : vector<6x512xf32>
    %11 = arith.mulf %0, %10 : vector<6x512xf32>
    %c8 = arith.constant 8 : index
    %c0_5 = arith.constant 0 : index
    %12 = vector.load %arg2[%c8, %c0_5] : memref<336x128xf32, #tpu.memory_space<vmem>>, vector<72x6xf32>
    %cst_6 = arith.constant dense<0.000000e+00> : vector<72x512xf32>
    %13 = tpu.matmul %12, %11, %cst_6 {dimension_numbers = #tpu.dot_dimension_numbers<[1], [0], [0], [1], [0, 0, 1, 1], [], []>} : vector<72x6xf32>, vector<6x512xf32>, vector<72x512xf32> -> vector<72x512xf32>
    %c192 = arith.constant 192 : index
    %c0_7 = arith.constant 0 : index
    %14 = vector.load %arg2[%c192, %c0_7] : memref<336x128xf32, #tpu.memory_space<vmem>>, vector<72x1xf32>
    %15 = vector.broadcast %14 : vector<72x1xf32> to vector<72x512xf32>
    %16 = arith.subf %13, %15 : vector<72x512xf32>
    %17 = arith.mulf %16, %16 : vector<72x512xf32>
    %cst_8 = arith.constant 1.000000e+00 : f32
    %18 = vector.broadcast %cst_8 : f32 to vector<72x512xf32>
    %19 = arith.subf %18, %17 : vector<72x512xf32>
    %cst_9 = arith.constant -5.000000e-01 : f32
    %20 = vector.broadcast %cst_9 : f32 to vector<72x512xf32>
    %21 = arith.mulf %20, %17 : vector<72x512xf32>
    %22 = math.exp %21 : vector<72x512xf32>
    %23 = arith.mulf %19, %22 : vector<72x512xf32>
    %c80 = arith.constant 80 : index
    %c0_10 = arith.constant 0 : index
    %24 = vector.load %arg2[%c80, %c0_10] : memref<336x128xf32, #tpu.memory_space<vmem>>, vector<32x6xf32>
    %cst_11 = arith.constant dense<0.000000e+00> : vector<32x512xf32>
    %25 = tpu.matmul %24, %11, %cst_11 {dimension_numbers = #tpu.dot_dimension_numbers<[1], [0], [0], [1], [0, 0, 1, 1], [], []>} : vector<32x6xf32>, vector<6x512xf32>, vector<32x512xf32> -> vector<32x512xf32>
    %c112 = arith.constant 112 : index
    %c0_12 = arith.constant 0 : index
    %26 = vector.load %arg2[%c112, %c0_12] : memref<336x128xf32, #tpu.memory_space<vmem>>, vector<32x72xf32>
    %cst_13 = arith.constant dense<0.000000e+00> : vector<32x512xf32>
    %27 = tpu.matmul %26, %23, %cst_13 {dimension_numbers = #tpu.dot_dimension_numbers<[1], [0], [0], [1], [0, 0, 1, 1], [], []>} : vector<32x72xf32>, vector<72x512xf32>, vector<32x512xf32> -> vector<32x512xf32>
    %28 = arith.addf %25, %27 : vector<32x512xf32>
    %c264 = arith.constant 264 : index
    %c0_14 = arith.constant 0 : index
    %29 = vector.load %arg2[%c264, %c0_14] : memref<336x128xf32, #tpu.memory_space<vmem>>, vector<32x1xf32>
    %30 = vector.broadcast %29 : vector<32x1xf32> to vector<32x512xf32>
    %31 = arith.addf %28, %30 : vector<32x512xf32>
    %cst_15 = arith.constant 0.000000e+00 : f32
    %32 = vector.broadcast %cst_15 : f32 to vector<32x512xf32>
    %33 = arith.cmpf ogt, %31, %32 : vector<32x512xf32>
    %cst_16 = arith.constant 1.000000e-01 : f32
    %34 = vector.broadcast %cst_16 : f32 to vector<32x512xf32>
    %35 = arith.mulf %34, %31 : vector<32x512xf32>
    %36 = arith.select %33, %31, %35 : vector<32x512xi1>, vector<32x512xf32>
    %c144 = arith.constant 144 : index
    %c0_17 = arith.constant 0 : index
    %37 = vector.load %arg2[%c144, %c0_17] : memref<336x128xf32, #tpu.memory_space<vmem>>, vector<32x32xf32>
    %cst_18 = arith.constant dense<0.000000e+00> : vector<32x512xf32>
    %38 = tpu.matmul %37, %36, %cst_18 {dimension_numbers = #tpu.dot_dimension_numbers<[1], [0], [0], [1], [0, 0, 1, 1], [], []>} : vector<32x32xf32>, vector<32x512xf32>, vector<32x512xf32> -> vector<32x512xf32>
    %c296 = arith.constant 296 : index
    %c0_19 = arith.constant 0 : index
    %39 = vector.load %arg2[%c296, %c0_19] : memref<336x128xf32, #tpu.memory_space<vmem>>, vector<32x1xf32>
    %40 = vector.broadcast %39 : vector<32x1xf32> to vector<32x512xf32>
    %41 = arith.addf %38, %40 : vector<32x512xf32>
    %cst_20 = arith.constant 0.000000e+00 : f32
    %42 = vector.broadcast %cst_20 : f32 to vector<32x512xf32>
    %43 = arith.cmpf ogt, %41, %42 : vector<32x512xf32>
    %cst_21 = arith.constant 1.000000e-01 : f32
    %44 = vector.broadcast %cst_21 : f32 to vector<32x512xf32>
    %45 = arith.mulf %44, %41 : vector<32x512xf32>
    %46 = arith.select %43, %41, %45 : vector<32x512xi1>, vector<32x512xf32>
    %47 = tpu.concatenate %36, %46 in 0 : vector<32x512xf32>, vector<32x512xf32> -> vector<64x512xf32>
    %c176 = arith.constant 176 : index
    %c0_22 = arith.constant 0 : index
    %48 = vector.load %arg2[%c176, %c0_22] : memref<336x128xf32, #tpu.memory_space<vmem>>, vector<1x64xf32>
    %cst_23 = arith.constant dense<0.000000e+00> : vector<1x512xf32>
    %49 = tpu.matmul %48, %47, %cst_23 {dimension_numbers = #tpu.dot_dimension_numbers<[1], [0], [0], [1], [0, 0, 1, 1], [], []>} : vector<1x64xf32>, vector<64x512xf32>, vector<1x512xf32> -> vector<1x512xf32>
    %c328 = arith.constant 328 : index
    %c0_24 = arith.constant 0 : index
    %50 = vector.load %arg2[%c328, %c0_24] : memref<336x128xf32, #tpu.memory_space<vmem>>, vector<1x1xf32>
    %51 = vector.broadcast %50 : vector<1x1xf32> to vector<1x512xf32>
    %52 = arith.addf %49, %51 : vector<1x512xf32>
    %cst_25 = arith.constant 0.000000e+00 : f32
    %53 = vector.broadcast %cst_25 : f32 to vector<1x512xf32>
    %54 = arith.maximumf %52, %53 : vector<1x512xf32>
    %c0_26 = arith.constant 0 : index
    %c0_27 = arith.constant 0 : index
    %55 = vector.load %arg3[%c0_26, %c0_27] : memref<1x512xf32, #tpu.memory_space<vmem>>, vector<1x512xf32>
    tpu.vector_store %arg3[%c0_26, %c0_27], %54 {strides = array<i32>} : memref<1x512xf32, #tpu.memory_space<vmem>>, vector<1x512xf32>,
    return
  }
  func.func @transform_0(%arg0: i32) -> (i32, i32) {
    %c0_i32 = arith.constant 0 : i32
    %c0_i32_0 = arith.constant 0 : i32
    return %c0_i32, %arg0 : i32, i32
  }
  func.func @transform_1(%arg0: i32) -> (i32, i32) {
    %c0_i32 = arith.constant 0 : i32
    %c0_i32_0 = arith.constant 0 : i32
    %c0_i32_1 = arith.constant 0 : i32
    return %c0_i32, %c0_i32_0 : i32, i32
  }
  func.func @transform_2(%arg0: i32) -> (i32, i32) {
    %c0_i32 = arith.constant 0 : i32
    %c0_i32_0 = arith.constant 0 : i32
    return %c0_i32, %arg0 : i32, i32
  }
}

</mosaic_0001>

<llo_original>
// kernel: ms_pinn_forward.1
$region0: #{ms_pinn_forward.1}
  #allocation0 [shape = 'u32[]', space=smem, size = 0x4, offset = 0x4, fixed_abs, tag = 'smem constant byte address 0x4 - core index']
  #allocation1 [shape = 'u32[144,128]{1,0:T(1,128)}', space=vmem, size = 0x12000, scoped, tag = 'internal scratch']
  %s0 = inlined_call_operand.hbm [shape: f32[6,1024], index: 0, kind: input, shape index: {}]
  %s1 = inlined_call_operand.hbm [shape: f32[336,128], index: 1, kind: input, shape index: {}]
  %s2 = inlined_call_operand.hbm [shape: f32[1,1024], index: 2, kind: output, shape index: {}]
  %s3 = sld [smem:[#allocation0]]
  $region49: #{ms_pinn_forward.1} parent=0
    _
  %s5 = ssub.s32 1, %s3
  %s6 = scalar_select 0, %s5, %s3
  $region1: #{ms_pinn_forward.1} parent=0
    #allocation2 [shape = 'u8[32768]{0}', space=vmem, size = 0x8000, scoped, tag = 'input window, operand 0']
    #allocation3 [shape = 's32[2]{0}', space=sflag, size = 0x8, scoped, tag = 'scoped memory for ms_pinn_forward.1']
    #allocation4 [shape = 's32[2]{0}', space=sflag, size = 0x8, scoped, tag = 'scoped memory for ms_pinn_forward.1']
    #allocation5 [shape = 'u8[172032]{0}', space=vmem, size = 0x2a000, scoped, tag = 'input window, operand 1, single buffered']
    #allocation6 [shape = 's32[1]{0}', space=sflag, size = 0x4, scoped, tag = 'scoped memory for ms_pinn_forward.1']
    #allocation7 [shape = 'u8[4096]{0}', space=vmem, size = 0x1000, scoped, tag = 'output window, operand 0']
    %7 = vsyncpa [#allocation3], 0
    %s8 = scalar_lea.sflag [#allocation3], 1
    %9 = vsyncpa %s8, 0
    %10 = vsyncpa [#allocation6], 0
    %11 = vsyncpa [#allocation4], 0
    %s12 = scalar_lea.sflag [#allocation4], 1
    %13 = vsyncpa %s12, 0
    loop: start=0, step=1, limit=4
    $region2: #{ms_pinn_forward.1} parent=1 // loop_pre_header
      _
    $region3: #{ms_pinn_forward.1} parent=1 // loop_header
      %s15 = sphi 0, %s19
      %p16 = scmp.ge.s32.totalorder %s15, 4
      %s25 = sphi 0, %s27
      %s28 = sphi 0, %s25
      %s29 = sphi 0, %s28
      %s45 = sphi 0, %s29
      %s49 = sphi 0, %s49
      %s51 = sphi 0, %s49
      %s52 = sphi 0, %s51
      %s66 = sphi 0, %s52
      %s72 = sphi 0, %s74
      %s75 = sphi 0, %s72
      %s76 = sphi 0, %s75
      %s92 = sphi 0, %s76
    $region4: #{ms_pinn_forward.1} parent=1 // loop_header_branch
      %18 = sbr.rel (%p16) target = $region8
    $region5: #{ms_pinn_forward.1} parent=1 // loop_body
      %s20 = ssub.s32 %s15, 1
      %s21 = ssub.s32 %s15, 2
      %s22 = sadd.s32 %s15, 1
      %s23 = ssub.s32 %s15, %s22
      %p24 = scmp.eq.s32.totalorder %s23, 0
      %s26 = sadd.s32 %s25, 1
      %s27 = scalar_select %p24, %s25, %s26
      %p30 = pneg %p24
      %p31 = scmp.eq.s32.totalorder %s15, 1
      %p32 = por %p30, %p31
      %p33 = scmp.ne.s32.totalorder %s25, %s28
      %p34 = scmp.eq.s32.totalorder %s15, 0
      %p35 = por %p33, %p34
      %p36 = scmp.ne.s32.totalorder %s25, %s28
      %p37 = scmp.eq.s32.totalorder %s20, 1
      %p38 = por %p36, %p37
      %p39 = scmp.ne.s32.totalorder %s28, %s29
      %p40 = scmp.eq.s32.totalorder %s20, 0
      %p41 = por %p39, %p40
      %p42 = scmp.ne.s32.totalorder %s28, %s29
      %p43 = scmp.eq.s32.totalorder %s21, 1
      %p44 = por %p42, %p43
      %p46 = scmp.ne.s32.totalorder %s29, %s45
      %p47 = scmp.eq.s32.totalorder %s21, 0
      %p48 = por %p46, %p47
      %s50 = sadd.s32 %s49, 1
      %p53 = scmp.eq.s32.totalorder %s15, 1
      %p54 = scmp.ne.s32.totalorder %s49, %s51
      %p55 = scmp.eq.s32.totalorder %s15, 0
      %p56 = por %p54, %p55
      %p57 = scmp.ne.s32.totalorder %s49, %s51
      %p58 = scmp.eq.s32.totalorder %s20, 1
      %p59 = por %p57, %p58
      %p60 = scmp.ne.s32.totalorder %s51, %s52
      %p61 = scmp.eq.s32.totalorder %s20, 0
      %p62 = por %p60, %p61
      %p63 = scmp.ne.s32.totalorder %s51, %s52
      %p64 = scmp.eq.s32.totalorder %s21, 1
      %p65 = por %p63, %p64
      %p67 = scmp.ne.s32.totalorder %s52, %s66
      %p68 = scmp.eq.s32.totalorder %s21, 0
      %p69 = por %p67, %p68
      %s70 = ssub.s32 %s15, %s22
      %p71 = scmp.eq.s32.totalorder %s70, 0
      %s73 = sadd.s32 %s72, 1
      %s74 = scalar_select %p71, %s72, %s73
      %p77 = pneg %p71
      %p78 = scmp.eq.s32.totalorder %s15, 1
      %p79 = por %p77, %p78
      %p80 = scmp.ne.s32.totalorder %s72, %s75
      %p81 = scmp.eq.s32.totalorder %s15, 0
      %p82 = por %p80, %p81
      %p83 = scmp.ne.s32.totalorder %s72, %s75
      %p84 = scmp.eq.s32.totalorder %s20, 1
      %p85 = por %p83, %p84
      %p86 = scmp.ne.s32.totalorder %s75, %s76
      %p87 = scmp.eq.s32.totalorder %s20, 0
      %p88 = por %p86, %p87
      %p89 = scmp.ne.s32.totalorder %s75, %s76
      %p90 = scmp.eq.s32.totalorder %s21, 1
      %p91 = por %p89, %p90
      %p93 = scmp.ne.s32.totalorder %s76, %s92
      %p94 = scmp.eq.s32.totalorder %s21, 0
      %p95 = por %p93, %p94
      %p96 = scmp.le.s32.totalorder 1, %s15
      %p97 = scmp.lt.s32.totalorder %s15, 3
      %p98 = pnand %p96, %p97
      %p99 = pneg %p98
      // Predicated region
      $region9: #{ms_pinn_forward.1} parent=5 // pred_check
        _
      $region10: #{ms_pinn_forward.1} parent=5 // pred_check_branch
        %101 = sbr.rel (%p98) target = $region12
      $region11: #{ms_pinn_forward.1} parent=5 // pred_region
        %s102 = ssub.s32 %s15, 1
        // Predicated region
        $region13: #{ms_pinn_forward.1} parent=11 // pred_check
          %p103 = pneg %p62
        $region14: #{ms_pinn_forward.1} parent=11 // pred_check_branch
          %105 = sbr.rel (%p103) target = $region16
        $region15: #{ms_pinn_forward.1} parent=11 // pred_region
          %s107 = ssub.s32 5376, 5376
          %108 = vsyncadd [#allocation6], %s107
          %s109 = sshll.u32 [#allocation5], 4
          %s110 = int_to_ptr.vmem [resolvable:$true] %s109
          %115 = dma.hbm_to_vmem [thread:$0]  %s1, 5376, %s110, [#allocation6], 128, 128, 8
        $region16: #{ms_pinn_forward.1} parent=11 // pred_fallthru
          _
      $region12: #{ms_pinn_forward.1} parent=5 // pred_fallthru
        _
      %p116 = scmp.lt.s32.totalorder %s15, 2
      // Predicated region
      $region17: #{ms_pinn_forward.1} parent=5 // pred_check
        %p117 = pneg %p116
      $region18: #{ms_pinn_forward.1} parent=5 // pred_check_branch
        %119 = sbr.rel (%p117) target = $region20
      $region19: #{ms_pinn_forward.1} parent=5 // pred_region
        // Predicated region
        $region21: #{ms_pinn_forward.1} parent=19 // pred_check
          %p120 = pneg %p35
        $region22: #{ms_pinn_forward.1} parent=19 // pred_check_branch
          %122 = sbr.rel (%p120) target = $region24
        $region23: #{ms_pinn_forward.1} parent=19 // pred_region
          %s123 = sand.u32 %s25, 1
          %s124 = scalar_lea.sflag [#allocation3], %s123
          %s125 = sand.u32 %s25, 1
          %s126 = smul.addr %s125, 32
          %s127 = scalar_lea.vmem [#allocation2], %s126
          %s128 = smul.u32 4, %s15
          %s130 = ssub.s32 512, 512
          %131 = vsyncadd %s124, %s130
          %s132 = smul.addr %s128, 128
          %s133 = scalar_lea.hbm %s0, %s132
          %s135 = sshll.u32 %s127, 4
          %s136 = int_to_ptr.vmem [resolvable:$true] %s135
          %138 = dma.hbm_to_vmem [thread:$0]  %s133, 512, %s136, %s124
        $region24: #{ms_pinn_forward.1} parent=19 // pred_fallthru
          _
      $region20: #{ms_pinn_forward.1} parent=5 // pred_fallthru
        _
      %p139 = scmp.le.s32.totalorder 1, %s15
      %p140 = scmp.lt.s32.totalorder %s15, 3
      %p141 = pnand %p139, %p140
      %p142 = pneg %p141
      // Predicated region
      $region25: #{ms_pinn_forward.1} parent=5 // pred_check
        _
      $region26: #{ms_pinn_forward.1} parent=5 // pred_check_branch
        %144 = sbr.rel (%p141) target = $region28
      $region27: #{ms_pinn_forward.1} parent=5 // pred_region
        %s145 = ssub.s32 %s15, 1
        %s146 = sand.u32 %s28, 1
        %s147 = scalar_lea.sflag [#allocation3], %s146
        %s148 = sand.u32 %s28, 1
        %s149 = smul.addr %s148, 32
        %s150 = scalar_lea.vmem [#allocation2], %s149
        // Predicated region
        $region29: #{ms_pinn_forward.1} parent=27 // pred_check
          %p151 = pneg %p41
        $region30: #{ms_pinn_forward.1} parent=27 // pred_check_branch
          %153 = sbr.rel (%p151) target = $region32
        $region31: #{ms_pinn_forward.1} parent=27 // pred_region
          %154 = dma.done %s147, 512
        $region32: #{ms_pinn_forward.1} parent=27 // pred_fallthru
          _
        // Predicated region
        $region33: #{ms_pinn_forward.1} parent=27 // pred_check
          %p155 = pneg %p62
        $region34: #{ms_pinn_forward.1} parent=27 // pred_check_branch
          %157 = sbr.rel (%p155) target = $region36
        $region35: #{ms_pinn_forward.1} parent=27 // pred_region
          %158 = dma.done [#allocation6], 5376
        $region36: #{ms_pinn_forward.1} parent=27 // pred_fallthru
          _
        %s159 = sand.u32 %s28, 1
        %s160 = scalar_lea.sflag [#allocation3], %s159
        %s161 = sand.u32 %s28, 1
        %s162 = smul.addr %s161, 32
        %s163 = scalar_lea.vmem [#allocation2], %s162
        %p164 = pneg %p41
        %p165 = pneg %p38
        %p166 = pneg %p62
        %p167 = pneg %p59
        %p168 = pneg %p88
        %p169 = pneg %p85
        %s170 = sand.u32 %s75, 1
        %s171 = scalar_lea.sflag [#allocation4], %s170
        %s172 = sand.u32 %s75, 1
        %s173 = smul.addr %s172, 4
        %s174 = scalar_lea.vmem [#allocation7], %s173
        %s175 = smul.u32 4, %s20
        %s176 = smul.u32 4, %s20
        %v177 = vld [vmem:[%s150] sm:$0x3f]
        %v178 = vld [vmem:[%s150 + $0x8] sm:$0x3f]
        %v179 = vld [vmem:[%s150 + $0x10] sm:$0x3f]
        %v180 = vld [vmem:[%s150 + $0x18] sm:$0x3f]
        %v181 = vld [vmem:[#allocation5] sm:$0x3f]
        %v182 = vld [vmem:[#allocation5 + $0xb8] sm:$0x3f]
        %184 = vset.pattern.permute.xlu0 0
        %185 = vperm.xlu0 %184, %v182
        %v186 = vpop.permute.xlu0 %185
        %vm188 = vcmask 48128
        %v190 = vsel %vm188, %v181, 0
        %vm192 = vcmask 1045504
        %v194 = vsel %vm192, %v177, 0
        %v197 = vsel %vm192, %v178, 0
        %v200 = vsel %vm192, %v179, 0
        %v203 = vsel %vm192, %v180, 0
        %205 = vmatprep.subr.mxu0 0.0
        %206 = vmatpush1.msra.mxu0 0.0
        %207 = vmatprep.subr.mxu0 0.0
        %208 = vmatpush1.msra.mxu0 0.0
        %209 = vmatprep.subr.mxu0 0.0
        %210 = vmatpush1.msra.mxu0 0.0
        %211 = vmatprep.subr.mxu0 0.0
        %212 = vmatpush1.msra.mxu0 0.0
        %213 = vmatprep.subr.mxu0 0.0
        %214 = vmatpush1.msra.mxu0 0.0
        %215 = vmatprep.subr.mxu0 0.0
        %216 = vmatpush1.msra.mxu0 0.0
        %217 = vmatprep.subr.mxu0 0.0
        %218 = vmatpush1.msra.mxu0 0.0
        %219 = vmatprep.subr.mxu0 0.0
        %220 = vmatpush1.msra.mxu0 0.0
        %221 = vmatprep.subr.mxu0 0.0
        %222 = vmatpush1.msra.mxu0 0.0
        %223 = vmatprep.subr.mxu0 0.0
        %224 = vmatpush1.msra.mxu0 0.0
        %225 = vmatprep.subr.mxu0 0.0
        %226 = vmatpush1.msra.mxu0 0.0
        %227 = vmatprep.subr.mxu0 0.0
        %228 = vmatpush1.msra.mxu0 0.0
        %229 = vmatprep.subr.mxu0 0.0
        %230 = vmatpush1.msra.mxu0 0.0
        %231 = vmatprep.subr.mxu0 0.0
        %232 = vmatpush1.msra.mxu0 0.0
        %233 = vmatprep.subr.mxu0 0.0
        %234 = vmatpush1.msra.mxu0 0.0
        %235 = vmatprep.subr.mxu0 %v197
        %236 = vmatpush1.msra.mxu0 %v194
        %237 = vmatprep.subr.mxu0 0.0
        %238 = vmatpush2.msra.mxu0 0.0
        %239 = vmatprep.subr.mxu0 0.0
        %240 = vmatpush2.msra.mxu0 0.0
        %241 = vmatprep.subr.mxu0 0.0
        %242 = vmatpush2.msra.mxu0 0.0
        %243 = vmatprep.subr.mxu0 0.0
        %244 = vmatpush2.msra.mxu0 0.0
        %245 = vmatprep.subr.mxu0 0.0
        %246 = vmatpush2.msra.mxu0 0.0
        %247 = vmatprep.subr.mxu0 0.0
        %248 = vmatpush2.msra.mxu0 0.0
        %249 = vmatprep.subr.mxu0 0.0
        %250 = vmatpush2.msra.mxu0 0.0
        %251 = vmatprep.subr.mxu0 0.0
        %252 = vmatpush2.msra.mxu0 0.0
        %253 = vmatprep.subr.mxu0 0.0
        %254 = vmatpush2.msra.mxu0 0.0
        %255 = vmatprep.subr.mxu0 0.0
        %256 = vmatpush2.msra.mxu0 0.0
        %257 = vmatprep.subr.mxu0 0.0
        %258 = vmatpush2.msra.mxu0 0.0
        %259 = vmatprep.subr.mxu0 0.0
        %260 = vmatpush2.msra.mxu0 0.0
        %261 = vmatprep.subr.mxu0 0.0
        %262 = vmatpush2.msra.mxu0 0.0
        %263 = vmatprep.subr.mxu0 0.0
        %264 = vmatpush2.msra.mxu0 0.0
        %265 = vmatprep.subr.mxu0 0.0
        %266 = vmatpush2.msra.mxu0 0.0
        %267 = vmatprep.subr.mxu0 0.0
        %268 = vmatpush2.msra.mxu0 0.0
        %269 = vmatprep.mubr.f32.mxu0 0.0
        %270 = vmatmul.mubr.f32.gmra.mxu0 %v190
        %v271 = vpop.f32.mrf.mxu0
        %v272 = vadd.f32 %v186, %v271
        %v273 = vpop.f32.mrf.mxu0
        %v274 = vadd.f32 %v186, %v273
        %275 = vdwg.mxu0
        %276 = vmatprep.subr.mxu0 0.0
        %277 = vmatpush1.msra.mxu0 0.0
        %278 = vmatprep.subr.mxu0 0.0
        %279 = vmatpush1.msra.mxu0 0.0
        %280 = vmatprep.subr.mxu0 0.0
        %281 = vmatpush1.msra.mxu0 0.0
        %282 = vmatprep.subr.mxu0 0.0
        %283 = vmatpush1.msra.mxu0 0.0
        %284 = vmatprep.subr.mxu0 0.0
        %285 = vmatpush1.msra.mxu0 0.0
        %286 = vmatprep.subr.mxu0 0.0
        %287 = vmatpush1.msra.mxu0 0.0
        %288 = vmatprep.subr.mxu0 0.0
        %289 = vmatpush1.msra.mxu0 0.0
        %290 = vmatprep.subr.mxu0 0.0
        %291 = vmatpush1.msra.mxu0 0.0
        %292 = vmatprep.subr.mxu0 0.0
        %293 = vmatpush1.msra.mxu0 0.0
        %294 = vmatprep.subr.mxu0 0.0
        %295 = vmatpush1.msra.mxu0 0.0
        %296 = vmatprep.subr.mxu0 0.0
        %297 = vmatpush1.msra.mxu0 0.0
        %298 = vmatprep.subr.mxu0 0.0
        %299 = vmatpush1.msra.mxu0 0.0
        %300 = vmatprep.subr.mxu0 0.0
        %301 = vmatpush1.msra.mxu0 0.0
        %302 = vmatprep.subr.mxu0 0.0
        %303 = vmatpush1.msra.mxu0 0.0
        %304 = vmatprep.subr.mxu0 0.0
        %305 = vmatpush1.msra.mxu0 0.0
        %306 = vmatprep.subr.mxu0 %v203
        %307 = vmatpush1.msra.mxu0 %v200
        %308 = vmatprep.subr.mxu0 0.0
        %309 = vmatpush2.msra.mxu0 0.0
        %310 = vmatprep.subr.mxu0 0.0
        %311 = vmatpush2.msra.mxu0 0.0
        %312 = vmatprep.subr.mxu0 0.0
        %313 = vmatpush2.msra.mxu0 0.0
        %314 = vmatprep.subr.mxu0 0.0
        %315 = vmatpush2.msra.mxu0 0.0
        %316 = vmatprep.subr.mxu0 0.0
        %317 = vmatpush2.msra.mxu0 0.0
        %318 = vmatprep.subr.mxu0 0.0
        %319 = vmatpush2.msra.mxu0 0.0
        %320 = vmatprep.subr.mxu0 0.0
        %321 = vmatpush2.msra.mxu0 0.0
        %322 = vmatprep.subr.mxu0 0.0
        %323 = vmatpush2.msra.mxu0 0.0
        %324 = vmatprep.subr.mxu0 0.0
        %325 = vmatpush2.msra.mxu0 0.0
        %326 = vmatprep.subr.mxu0 0.0
        %327 = vmatpush2.msra.mxu0 0.0
        %328 = vmatprep.subr.mxu0 0.0
        %329 = vmatpush2.msra.mxu0 0.0
        %330 = vmatprep.subr.mxu0 0.0
        %331 = vmatpush2.msra.mxu0 0.0
        %332 = vmatprep.subr.mxu0 0.0
        %333 = vmatpush2.msra.mxu0 0.0
        %334 = vmatprep.subr.mxu0 0.0
        %335 = vmatpush2.msra.mxu0 0.0
        %336 = vmatprep.subr.mxu0 0.0
        %337 = vmatpush2.msra.mxu0 0.0
        %338 = vmatprep.subr.mxu0 0.0
        %339 = vmatpush2.msra.mxu0 0.0
        %340 = vmatprep.mubr.f32.mxu0 0.0
        %341 = vmatmul.mubr.f32.gmra.mxu0 %v190
        %v342 = vpop.f32.mrf.mxu0
        %v343 = vadd.f32 %v186, %v342
        %v344 = vpop.f32.mrf.mxu0
        %v345 = vadd.f32 %v186, %v344
        %346 = vdwg.mxu0
        %v347 = vxor.u32 %v272, 2147483648
        %v348 = vxor.u32 %v274, 2147483648
        %v349 = vxor.u32 %v343, 2147483648
        %v350 = vxor.u32 %v345, 2147483648
        %v351 = vmul.f32 %v347, 1.442695
        %v352 = vpow.pop %v351
        %v353 = vmul.f32 %v348, 1.442695
        %v354 = vpow.pop %v353
        %v355 = vmul.f32 %v349, 1.442695
        %v356 = vpow.pop %v355
        %v357 = vmul.f32 %v350, 1.442695
        %v358 = vpow.pop %v357
        %v359 = vadd.f32 %v352, 1.0
        %v360 = vadd.f32 %v354, 1.0
        %v361 = vadd.f32 %v356, 1.0
        %v362 = vadd.f32 %v358, 1.0
        %v363 = vrcp.pop %v359
        %v364 = vmul.f32 1.0, %v363
        %v365 = vrcp.pop %v360
        %v366 = vmul.f32 1.0, %v365
        %v367 = vrcp.pop %v361
        %v368 = vmul.f32 1.0, %v367
        %v369 = vrcp.pop %v362
        %v370 = vmul.f32 1.0, %v369
        %v371 = vmul.f32 %v177, %v364
        %v372 = vmul.f32 %v178, %v366
        %v373 = vmul.f32 %v179, %v368
        %v374 = vmul.f32 %v180, %v370
        %v375 = vld [vmem:[#allocation5 + $0x8] sm:$0xff]
        %v376 = vld [vmem:[#allocation5 + $0x10] sm:$0xff]
        %v377 = vld [vmem:[#allocation5 + $0x18] sm:$0xff]
        %v378 = vld [vmem:[#allocation5 + $0x20] sm:$0xff]
        %v379 = vld [vmem:[#allocation5 + $0x28] sm:$0xff]
        %v380 = vld [vmem:[#allocation5 + $0x30] sm:$0xff]
        %v381 = vld [vmem:[#allocation5 + $0x38] sm:$0xff]
        %v382 = vld [vmem:[#allocation5 + $0x40] sm:$0xff]
        %v383 = vld [vmem:[#allocation5 + $0x48] sm:$0xff]
        %v385 = vsel %vm188, %v375, 0
        %v388 = vsel %vm188, %v376, 0
        %v391 = vsel %vm188, %v377, 0
        %v394 = vsel %vm188, %v378, 0
        %v397 = vsel %vm188, %v379, 0
        %v400 = vsel %vm188, %v380, 0
        %v403 = vsel %vm188, %v381, 0
        %v406 = vsel %vm188, %v382, 0
        %v409 = vsel %vm188, %v383, 0
        %v412 = vsel %vm192, %v371, 0
        %v415 = vsel %vm192, %v372, 0
        %v418 = vsel %vm192, %v373, 0
        %v421 = vsel %vm192, %v374, 0
        %423 = vmatprep.subr.mxu0 0.0
        %424 = vmatpush1.msra.mxu0 0.0
        %425 = vmatprep.subr.mxu0 0.0
        %426 = vmatpush1.msra.mxu0 0.0
        %427 = vmatprep.subr.mxu0 0.0
        %428 = vmatpush1.msra.mxu0 0.0
        %429 = vmatprep.subr.mxu0 0.0
        %430 = vmatpush1.msra.mxu0 0.0
        %431 = vmatprep.subr.mxu0 0.0
        %432 = vmatpush1.msra.mxu0 0.0
        %433 = vmatprep.subr.mxu0 0.0
        %434 = vmatpush1.msra.mxu0 0.0
        %435 = vmatprep.subr.mxu0 0.0
        %436 = vmatpush1.msra.mxu0 0.0
        %437 = vmatprep.subr.mxu0 0.0
        %438 = vmatpush1.msra.mxu0 0.0
        %439 = vmatprep.subr.mxu0 0.0
        %440 = vmatpush1.msra.mxu0 0.0
        %441 = vmatprep.subr.mxu0 0.0
        %442 = vmatpush1.msra.mxu0 0.0
        %443 = vmatprep.subr.mxu0 0.0
        %444 = vmatpush1.msra.mxu0 0.0
        %445 = vmatprep.subr.mxu0 0.0
        %446 = vmatpush1.msra.mxu0 0.0
        %447 = vmatprep.subr.mxu0 0.0
        %448 = vmatpush1.msra.mxu0 0.0
        %449 = vmatprep.subr.mxu0 0.0
        %450 = vmatpush1.msra.mxu0 0.0
        %451 = vmatprep.subr.mxu0 0.0
        %452 = vmatpush1.msra.mxu0 0.0
        %453 = vmatprep.subr.mxu0 %v415
        %454 = vmatpush1.msra.mxu0 %v412
        %455 = vmatprep.subr.mxu0 0.0
        %456 = vmatpush2.msra.mxu0 0.0
        %457 = vmatprep.subr.mxu0 0.0
        %458 = vmatpush2.msra.mxu0 0.0
        %459 = vmatprep.subr.mxu0 0.0
        %460 = vmatpush2.msra.mxu0 0.0
        %461 = vmatprep.subr.mxu0 0.0
        %462 = vmatpush2.msra.mxu0 0.0
        %463 = vmatprep.subr.mxu0 0.0
        %464 = vmatpush2.msra.mxu0 0.0
        %465 = vmatprep.subr.mxu0 0.0
        %466 = vmatpush2.msra.mxu0 0.0
        %467 = vmatprep.subr.mxu0 0.0
        %468 = vmatpush2.msra.mxu0 0.0
        %469 = vmatprep.subr.mxu0 0.0
        %470 = vmatpush2.msra.mxu0 0.0
        %471 = vmatprep.subr.mxu0 0.0
        %472 = vmatpush2.msra.mxu0 0.0
        %473 = vmatprep.subr.mxu0 0.0
        %474 = vmatpush2.msra.mxu0 0.0
        %475 = vmatprep.subr.mxu0 0.0
        %476 = vmatpush2.msra.mxu0 0.0
        %477 = vmatprep.subr.mxu0 0.0
        %478 = vmatpush2.msra.mxu0 0.0
        %479 = vmatprep.subr.mxu0 0.0
        %480 = vmatpush2.msra.mxu0 0.0
        %481 = vmatprep.subr.mxu0 0.0
        %482 = vmatpush2.msra.mxu0 0.0
        %483 = vmatprep.subr.mxu0 0.0
        %484 = vmatpush2.msra.mxu0 0.0
        %485 = vmatprep.subr.mxu0 0.0
        %486 = vmatpush2.msra.mxu0 0.0
        %487 = vmatprep.mubr.f32.mxu0 0.0
        %488 = vmatmul.mubr.f32.gmra.mxu0 %v385
        %v489 = vpop.f32.mrf.mxu0
        %v490 = vadd.f32 0.0, %v489
        %v491 = vpop.f32.mrf.mxu0
        %v492 = vadd.f32 0.0, %v491
        %493 = vmatprep.mubr.f32.mxu0 0.0
        %494 = vmatmul.mubr.f32.gmra.mxu0 %v388
        %v495 = vpop.f32.mrf.mxu0
        %v496 = vadd.f32 0.0, %v495
        %v497 = vpop.f32.mrf.mxu0
        %v498 = vadd.f32 0.0, %v497
        %499 = vmatprep.mubr.f32.mxu0 0.0
        %500 = vmatmul.mubr.f32.gmra.mxu0 %v391
        %v501 = vpop.f32.mrf.mxu0
        %v502 = vadd.f32 0.0, %v501
        %v503 = vpop.f32.mrf.mxu0
        %v504 = vadd.f32 0.0, %v503
        %505 = vmatprep.mubr.f32.mxu0 0.0
        %506 = vmatmul.mubr.f32.gmra.mxu0 %v394
        %v507 = vpop.f32.mrf.mxu0
        %v508 = vadd.f32 0.0, %v507
        %v509 = vpop.f32.mrf.mxu0
        %v510 = vadd.f32 0.0, %v509
        %511 = vmatprep.mubr.f32.mxu0 0.0
        %512 = vmatmul.mubr.f32.gmra.mxu0 %v397
        %v513 = vpop.f32.mrf.mxu0
        %v514 = vadd.f32 0.0, %v513
        %v515 = vpop.f32.mrf.mxu0
        %v516 = vadd.f32 0.0, %v515
        %517 = vmatprep.mubr.f32.mxu0 0.0
        %518 = vmatmul.mubr.f32.gmra.mxu0 %v400
        %v519 = vpop.f32.mrf.mxu0
        %v520 = vadd.f32 0.0, %v519
        %v521 = vpop.f32.mrf.mxu0
        %v522 = vadd.f32 0.0, %v521
        %523 = vmatprep.mubr.f32.mxu0 0.0
        %524 = vmatmul.mubr.f32.gmra.mxu0 %v403
        %v525 = vpop.f32.mrf.mxu0
        %v526 = vadd.f32 0.0, %v525
        %v527 = vpop.f32.mrf.mxu0
        %v528 = vadd.f32 0.0, %v527
        %529 = vmatprep.mubr.f32.mxu0 0.0
        %530 = vmatmul.mubr.f32.gmra.mxu0 %v406
        %v531 = vpop.f32.mrf.mxu0
        %v532 = vadd.f32 0.0, %v531
        %v533 = vpop.f32.mrf.mxu0
        %v534 = vadd.f32 0.0, %v533
        %535 = vmatprep.mubr.f32.mxu0 0.0
        %536 = vmatmul.mubr.f32.gmra.mxu0 %v409
        %v537 = vpop.f32.mrf.mxu0
        %v538 = vadd.f32 0.0, %v537
        %v539 = vpop.f32.mrf.mxu0
        %v540 = vadd.f32 0.0, %v539
        %541 = vdwg.mxu0
        %542 = vmatprep.subr.mxu0 0.0
        %543 = vmatpush1.msra.mxu0 0.0
        %544 = vmatprep.subr.mxu0 0.0
        %545 = vmatpush1.msra.mxu0 0.0
        %546 = vmatprep.subr.mxu0 0.0
        %547 = vmatpush1.msra.mxu0 0.0
        %548 = vmatprep.subr.mxu0 0.0
        %549 = vmatpush1.msra.mxu0 0.0
        %550 = vmatprep.subr.mxu0 0.0
        %551 = vmatpush1.msra.mxu0 0.0
        %552 = vmatprep.subr.mxu0 0.0
        %553 = vmatpush1.msra.mxu0 0.0
        %554 = vmatprep.subr.mxu0 0.0
        %555 = vmatpush1.msra.mxu0 0.0
        %556 = vmatprep.subr.mxu0 0.0
        %557 = vmatpush1.msra.mxu0 0.0
        %558 = vmatprep.subr.mxu0 0.0
        %559 = vmatpush1.msra.mxu0 0.0
        %560 = vmatprep.subr.mxu0 0.0
        %561 = vmatpush1.msra.mxu0 0.0
        %562 = vmatprep.subr.mxu0 0.0
        %563 = vmatpush1.msra.mxu0 0.0
        %564 = vmatprep.subr.mxu0 0.0
        %565 = vmatpush1.msra.mxu0 0.0
        %566 = vmatprep.subr.mxu0 0.0
        %567 = vmatpush1.msra.mxu0 0.0
        %568 = vmatprep.subr.mxu0 0.0
        %569 = vmatpush1.msra.mxu0 0.0
        %570 = vmatprep.subr.mxu0 0.0
        %571 = vmatpush1.msra.mxu0 0.0
        %572 = vmatprep.subr.mxu0 %v421
        %573 = vmatpush1.msra.mxu0 %v418
        %574 = vmatprep.subr.mxu0 0.0
        %575 = vmatpush2.msra.mxu0 0.0
        %576 = vmatprep.subr.mxu0 0.0
        %577 = vmatpush2.msra.mxu0 0.0
        %578 = vmatprep.subr.mxu0 0.0
        %579 = vmatpush2.msra.mxu0 0.0
        %580 = vmatprep.subr.mxu0 0.0
        %581 = vmatpush2.msra.mxu0 0.0
        %582 = vmatprep.subr.mxu0 0.0
        %583 = vmatpush2.msra.mxu0 0.0
        %584 = vmatprep.subr.mxu0 0.0
        %585 = vmatpush2.msra.mxu0 0.0
        %586 = vmatprep.subr.mxu0 0.0
        %587 = vmatpush2.msra.mxu0 0.0
        %588 = vmatprep.subr.mxu0 0.0
        %589 = vmatpush2.msra.mxu0 0.0
        %590 = vmatprep.subr.mxu0 0.0
        %591 = vmatpush2.msra.mxu0 0.0
        %592 = vmatprep.subr.mxu0 0.0
        %593 = vmatpush2.msra.mxu0 0.0
        %594 = vmatprep.subr.mxu0 0.0
        %595 = vmatpush2.msra.mxu0 0.0
        %596 = vmatprep.subr.mxu0 0.0
        %597 = vmatpush2.msra.mxu0 0.0
        %598 = vmatprep.subr.mxu0 0.0
        %599 = vmatpush2.msra.mxu0 0.0
        %600 = vmatprep.subr.mxu0 0.0
        %601 = vmatpush2.msra.mxu0 0.0
        %602 = vmatprep.subr.mxu0 0.0
        %603 = vmatpush2.msra.mxu0 0.0
        %604 = vmatprep.subr.mxu0 0.0
        %605 = vmatpush2.msra.mxu0 0.0
        %606 = vmatprep.mubr.f32.mxu0 0.0
        %607 = vmatmul.mubr.f32.gmra.mxu0 %v385
        %v608 = vpop.f32.mrf.mxu0
        %v609 = vadd.f32 0.0, %v608
        %v610 = vpop.f32.mrf.mxu0
        %v611 = vadd.f32 0.0, %v610
        %612 = vmatprep.mubr.f32.mxu0 0.0
        %613 = vmatmul.mubr.f32.gmra.mxu0 %v388
        %v614 = vpop.f32.mrf.mxu0
        %v615 = vadd.f32 0.0, %v614
        %v616 = vpop.f32.mrf.mxu0
        %v617 = vadd.f32 0.0, %v616
        %618 = vmatprep.mubr.f32.mxu0 0.0
        %619 = vmatmul.mubr.f32.gmra.mxu0 %v391
        %v620 = vpop.f32.mrf.mxu0
        %v621 = vadd.f32 0.0, %v620
        %v622 = vpop.f32.mrf.mxu0
        %v623 = vadd.f32 0.0, %v622
        %624 = vmatprep.mubr.f32.mxu0 0.0
        %625 = vmatmul.mubr.f32.gmra.mxu0 %v394
        %v626 = vpop.f32.mrf.mxu0
        %v627 = vadd.f32 0.0, %v626
        %v628 = vpop.f32.mrf.mxu0
        %v629 = vadd.f32 0.0, %v628
        %630 = vmatprep.mubr.f32.mxu0 0.0
        %631 = vmatmul.mubr.f32.gmra.mxu0 %v397
        %v632 = vpop.f32.mrf.mxu0
        %v633 = vadd.f32 0.0, %v632
        %v634 = vpop.f32.mrf.mxu0
        %v635 = vadd.f32 0.0, %v634
        %636 = vmatprep.mubr.f32.mxu0 0.0
        %637 = vmatmul.mubr.f32.gmra.mxu0 %v400
        %v638 = vpop.f32.mrf.mxu0
        %v639 = vadd.f32 0.0, %v638
        %v640 = vpop.f32.mrf.mxu0
        %v641 = vadd.f32 0.0, %v640
        %642 = vmatprep.mubr.f32.mxu0 0.0
        %643 = vmatmul.mubr.f32.gmra.mxu0 %v403
        %v644 = vpop.f32.mrf.mxu0
        %v645 = vadd.f32 0.0, %v644
        %v646 = vpop.f32.mrf.mxu0
        %v647 = vadd.f32 0.0, %v646
        %648 = vmatprep.mubr.f32.mxu0 0.0
        %649 = vmatmul.mubr.f32.gmra.mxu0 %v406
        %v650 = vpop.f32.mrf.mxu0
        %v651 = vadd.f32 0.0, %v650
        %v652 = vpop.f32.mrf.mxu0
        %v653 = vadd.f32 0.0, %v652
        %654 = vmatprep.mubr.f32.mxu0 0.0
        %655 = vmatmul.mubr.f32.gmra.mxu0 %v409
        %v656 = vpop.f32.mrf.mxu0
        %v657 = vadd.f32 0.0, %v656
        %v658 = vpop.f32.mrf.mxu0
        %v659 = vadd.f32 0.0, %v658
        %660 = vdwg.mxu0
        %v661 = vld [vmem:[#allocation5 + $0xc0] sm:$0xff]
        %v662 = vld [vmem:[#allocation5 + $0xc8] sm:$0xff]
        %v663 = vld [vmem:[#allocation5 + $0xd0] sm:$0xff]
        %v664 = vld [vmem:[#allocation5 + $0xd8] sm:$0xff]
        %v665 = vld [vmem:[#allocation5 + $0xe0] sm:$0xff]
        %v666 = vld [vmem:[#allocation5 + $0xe8] sm:$0xff]
        %v667 = vld [vmem:[#allocation5 + $0xf0] sm:$0xff]
        %v668 = vld [vmem:[#allocation5 + $0xf8] sm:$0xff]
        %v669 = vld [vmem:[#allocation5 + $0x100] sm:$0xff]
        %671 = vset.pattern.permute.xlu0 0
        %672 = vperm.xlu0 %671, %v661
        %v673 = vpop.permute.xlu0 %672
        %676 = vset.pattern.permute.xlu0 0
        %677 = vperm.xlu0 %676, %v662
        %v678 = vpop.permute.xlu0 %677
        %681 = vset.pattern.permute.xlu0 0
        %682 = vperm.xlu0 %681, %v663
        %v683 = vpop.permute.xlu0 %682
        %686 = vset.pattern.permute.xlu0 0
        %687 = vperm.xlu0 %686, %v664
        %v688 = vpop.permute.xlu0 %687
        %691 = vset.pattern.permute.xlu0 0
        %692 = vperm.xlu0 %691, %v665
        %v693 = vpop.permute.xlu0 %692
        %696 = vset.pattern.permute.xlu0 0
        %697 = vperm.xlu0 %696, %v666
        %v698 = vpop.permute.xlu0 %697
        %701 = vset.pattern.permute.xlu0 0
        %702 = vperm.xlu0 %701, %v667
        %v703 = vpop.permute.xlu0 %702
        %706 = vset.pattern.permute.xlu0 0
        %707 = vperm.xlu0 %706, %v668
        %v708 = vpop.permute.xlu0 %707
        %711 = vset.pattern.permute.xlu0 0
        %712 = vperm.xlu0 %711, %v669
        %v713 = vpop.permute.xlu0 %712
        %v715 = vsub.f32 %v490, %v673
        %v716 = vsub.f32 %v492, %v673
        %v717 = vsub.f32 %v609, %v673
        %v718 = vsub.f32 %v611, %v673
        %v719 = vsub.f32 %v496, %v678
        %v720 = vsub.f32 %v498, %v678
        %v721 = vsub.f32 %v615, %v678
        %v722 = vsub.f32 %v617, %v678
        %v723 = vsub.f32 %v502, %v683
        %v724 = vsub.f32 %v504, %v683
        %v725 = vsub.f32 %v621, %v683
        %v726 = vsub.f32 %v623, %v683
        %v727 = vsub.f32 %v508, %v688
        %v728 = vsub.f32 %v510, %v688
        %v729 = vsub.f32 %v627, %v688
        %v730 = vsub.f32 %v629, %v688
        %v731 = vsub.f32 %v514, %v693
        %v732 = vsub.f32 %v516, %v693
        %v733 = vsub.f32 %v633, %v693
        %v734 = vsub.f32 %v635, %v693
        %v735 = vsub.f32 %v520, %v698
        %v736 = vsub.f32 %v522, %v698
        %v737 = vsub.f32 %v639, %v698
        %v738 = vsub.f32 %v641, %v698
        %v739 = vsub.f32 %v526, %v703
        %v740 = vsub.f32 %v528, %v703
        %v741 = vsub.f32 %v645, %v703
        %v742 = vsub.f32 %v647, %v703
        %v743 = vsub.f32 %v532, %v708
        %v744 = vsub.f32 %v534, %v708
        %v745 = vsub.f32 %v651, %v708
        %v746 = vsub.f32 %v653, %v708
        %v747 = vsub.f32 %v538, %v713
        %v748 = vsub.f32 %v540, %v713
        %v749 = vsub.f32 %v657, %v713
        %v750 = vsub.f32 %v659, %v713
        %v751 = vmul.f32 %v715, %v715
        %v752 = vmul.f32 %v716, %v716
        %v753 = vmul.f32 %v717, %v717
        %v754 = vmul.f32 %v718, %v718
        %v755 = vmul.f32 %v719, %v719
        %v756 = vmul.f32 %v720, %v720
        %v757 = vmul.f32 %v721, %v721
        %v758 = vmul.f32 %v722, %v722
        %v759 = vmul.f32 %v723, %v723
        %v760 = vmul.f32 %v724, %v724
        %v761 = vmul.f32 %v725, %v725
        %v762 = vmul.f32 %v726, %v726
        %v763 = vmul.f32 %v727, %v727
        %v764 = vmul.f32 %v728, %v728
        %v765 = vmul.f32 %v729, %v729
        %v766 = vmul.f32 %v730, %v730
        %v767 = vmul.f32 %v731, %v731
        %v768 = vmul.f32 %v732, %v732
        %v769 = vmul.f32 %v733, %v733
        %v770 = vmul.f32 %v734, %v734
        %v771 = vmul.f32 %v735, %v735
        %v772 = vmul.f32 %v736, %v736
        %v773 = vmul.f32 %v737, %v737
        %v774 = vmul.f32 %v738, %v738
        %v775 = vmul.f32 %v739, %v739
        %v776 = vmul.f32 %v740, %v740
        %v777 = vmul.f32 %v741, %v741
        %v778 = vmul.f32 %v742, %v742
        %v779 = vmul.f32 %v743, %v743
        %v780 = vmul.f32 %v744, %v744
        %v781 = vmul.f32 %v745, %v745
        %v782 = vmul.f32 %v746, %v746
        %v783 = vmul.f32 %v747, %v747
        %v784 = vmul.f32 %v748, %v748
        %v785 = vmul.f32 %v749, %v749
        %v786 = vmul.f32 %v750, %v750
        %v787 = vsub.f32 1.0, %v751
        %v788 = vsub.f32 1.0, %v752
        %v789 = vsub.f32 1.0, %v753
        %v790 = vsub.f32 1.0, %v754
        %v791 = vsub.f32 1.0, %v755
        %v792 = vsub.f32 1.0, %v756
        %v793 = vsub.f32 1.0, %v757
        %v794 = vsub.f32 1.0, %v758
        %v795 = vsub.f32 1.0, %v759
        %v796 = vsub.f32 1.0, %v760
        %v797 = vsub.f32 1.0, %v761
        %v798 = vsub.f32 1.0, %v762
        %v799 = vsub.f32 1.0, %v763
        %v800 = vsub.f32 1.0, %v764
        %v801 = vsub.f32 1.0, %v765
        %v802 = vsub.f32 1.0, %v766
        %v803 = vsub.f32 1.0, %v767
        %v804 = vsub.f32 1.0, %v768
        %v805 = vsub.f32 1.0, %v769
        %v806 = vsub.f32 1.0, %v770
        %v807 = vsub.f32 1.0, %v771
        %v808 = vsub.f32 1.0, %v772
        %v809 = vsub.f32 1.0, %v773
        %v810 = vsub.f32 1.0, %v774
        %v811 = vsub.f32 1.0, %v775
        %v812 = vsub.f32 1.0, %v776
        %v813 = vsub.f32 1.0, %v777
        %v814 = vsub.f32 1.0, %v778
        %v815 = vsub.f32 1.0, %v779
        %v816 = vsub.f32 1.0, %v780
        %v817 = vsub.f32 1.0, %v781
        %v818 = vsub.f32 1.0, %v782
        %v819 = vsub.f32 1.0, %v783
        %v820 = vsub.f32 1.0, %v784
        %v821 = vsub.f32 1.0, %v785
        %v822 = vsub.f32 1.0, %v786
        %v823 = vmul.f32 %v751, -0.5
        %v824 = vmul.f32 %v752, -0.5
        %v825 = vmul.f32 %v753, -0.5
        %v826 = vmul.f32 %v754, -0.5
        %v827 = vmul.f32 %v755, -0.5
        %v828 = vmul.f32 %v756, -0.5
        %v829 = vmul.f32 %v757, -0.5
        %v830 = vmul.f32 %v758, -0.5
        %v831 = vmul.f32 %v759, -0.5
        %v832 = vmul.f32 %v760, -0.5
        %v833 = vmul.f32 %v761, -0.5
        %v834 = vmul.f32 %v762, -0.5
        %v835 = vmul.f32 %v763, -0.5
        %v836 = vmul.f32 %v764, -0.5
        %v837 = vmul.f32 %v765, -0.5
        %v838 = vmul.f32 %v766, -0.5
        %v839 = vmul.f32 %v767, -0.5
        %v840 = vmul.f32 %v768, -0.5
        %v841 = vmul.f32 %v769, -0.5
        %v842 = vmul.f32 %v770, -0.5
        %v843 = vmul.f32 %v771, -0.5
        %v844 = vmul.f32 %v772, -0.5
        %v845 = vmul.f32 %v773, -0.5
        %v846 = vmul.f32 %v774, -0.5
        %v847 = vmul.f32 %v775, -0.5
        %v848 = vmul.f32 %v776, -0.5
        %v849 = vmul.f32 %v777, -0.5
        %v850 = vmul.f32 %v778, -0.5
        %v851 = vmul.f32 %v779, -0.5
        %v852 = vmul.f32 %v780, -0.5
        %v853 = vmul.f32 %v781, -0.5
        %v854 = vmul.f32 %v782, -0.5
        %v855 = vmul.f32 %v783, -0.5
        %v856 = vmul.f32 %v784, -0.5
        %v857 = vmul.f32 %v785, -0.5
        %v858 = vmul.f32 %v786, -0.5
        %v859 = vmul.f32 %v823, 1.442695
        %v860 = vpow.pop %v859
        %v861 = vmul.f32 %v824, 1.442695
        %v862 = vpow.pop %v861
        %v863 = vmul.f32 %v825, 1.442695
        %v864 = vpow.pop %v863
        %v865 = vmul.f32 %v826, 1.442695
        %v866 = vpow.pop %v865
        %v867 = vmul.f32 %v827, 1.442695
        %v868 = vpow.pop %v867
        %v869 = vmul.f32 %v828, 1.442695
        %v870 = vpow.pop %v869
        %v871 = vmul.f32 %v829, 1.442695
        %v872 = vpow.pop %v871
        %v873 = vmul.f32 %v830, 1.442695
        %v874 = vpow.pop %v873
        %v875 = vmul.f32 %v831, 1.442695
        %v876 = vpow.pop %v875
        %v877 = vmul.f32 %v832, 1.442695
        %v878 = vpow.pop %v877
        %v879 = vmul.f32 %v833, 1.442695
        %v880 = vpow.pop %v879
        %v881 = vmul.f32 %v834, 1.442695
        %v882 = vpow.pop %v881
        %v883 = vmul.f32 %v835, 1.442695
        %v884 = vpow.pop %v883
        %v885 = vmul.f32 %v836, 1.442695
        %v886 = vpow.pop %v885
        %v887 = vmul.f32 %v837, 1.442695
        %v888 = vpow.pop %v887
        %v889 = vmul.f32 %v838, 1.442695
        %v890 = vpow.pop %v889
        %v891 = vmul.f32 %v839, 1.442695
        %v892 = vpow.pop %v891
        %v893 = vmul.f32 %v840, 1.442695
        %v894 = vpow.pop %v893
        %v895 = vmul.f32 %v841, 1.442695
        %v896 = vpow.pop %v895
        %v897 = vmul.f32 %v842, 1.442695
        %v898 = vpow.pop %v897
        %v899 = vmul.f32 %v843, 1.442695
        %v900 = vpow.pop %v899
        %v901 = vmul.f32 %v844, 1.442695
        %v902 = vpow.pop %v901
        %v903 = vmul.f32 %v845, 1.442695
        %v904 = vpow.pop %v903
        %v905 = vmul.f32 %v846, 1.442695
        %v906 = vpow.pop %v905
        %v907 = vmul.f32 %v847, 1.442695
        %v908 = vpow.pop %v907
        %v909 = vmul.f32 %v848, 1.442695
        %v910 = vpow.pop %v909
        %v911 = vmul.f32 %v849, 1.442695
        %v912 = vpow.pop %v911
        %v913 = vmul.f32 %v850, 1.442695
        %v914 = vpow.pop %v913
        %v915 = vmul.f32 %v851, 1.442695
        %v916 = vpow.pop %v915
        %v917 = vmul.f32 %v852, 1.442695
        %v918 = vpow.pop %v917
        %v919 = vmul.f32 %v853, 1.442695
        %v920 = vpow.pop %v919
        %v921 = vmul.f32 %v854, 1.442695
        %v922 = vpow.pop %v921
        %v923 = vmul.f32 %v855, 1.442695
        %v924 = vpow.pop %v923
        %v925 = vmul.f32 %v856, 1.442695
        %v926 = vpow.pop %v925
        %v927 = vmul.f32 %v857, 1.442695
        %v928 = vpow.pop %v927
        %v929 = vmul.f32 %v858, 1.442695
        %v930 = vpow.pop %v929
        %v931 = vmul.f32 %v787, %v860
        %v932 = vmul.f32 %v788, %v862
        %v933 = vmul.f32 %v789, %v864
        %v934 = vmul.f32 %v790, %v866
        %v935 = vmul.f32 %v791, %v868
        %v936 = vmul.f32 %v792, %v870
        %v937 = vmul.f32 %v793, %v872
        %v938 = vmul.f32 %v794, %v874
        %v939 = vmul.f32 %v795, %v876
        %v940 = vmul.f32 %v796, %v878
        %v941 = vmul.f32 %v797, %v880
        %v942 = vmul.f32 %v798, %v882
        %v943 = vmul.f32 %v799, %v884
        %v944 = vmul.f32 %v800, %v886
        %v945 = vmul.f32 %v801, %v888
        %v946 = vmul.f32 %v802, %v890
        %v947 = vmul.f32 %v803, %v892
        %v948 = vmul.f32 %v804, %v894
        %v949 = vmul.f32 %v805, %v896
        %v950 = vmul.f32 %v806, %v898
        %v951 = vmul.f32 %v807, %v900
        %v952 = vmul.f32 %v808, %v902
        %v953 = vmul.f32 %v809, %v904
        %v954 = vmul.f32 %v810, %v906
        %v955 = vmul.f32 %v811, %v908
        %v956 = vmul.f32 %v812, %v910
        %v957 = vmul.f32 %v813, %v912
        %v958 = vmul.f32 %v814, %v914
        %v959 = vmul.f32 %v815, %v916
        %v960 = vmul.f32 %v816, %v918
        %v961 = vmul.f32 %v817, %v920
        %v962 = vmul.f32 %v818, %v922
        %v963 = vmul.f32 %v819, %v924
        %v964 = vmul.f32 %v820, %v926
        %v965 = vmul.f32 %v821, %v928
        %v966 = vmul.f32 %v822, %v930
        %v967 = vld [vmem:[#allocation5 + $0x50] sm:$0xff]
        %v968 = vld [vmem:[#allocation5 + $0x58] sm:$0xff]
        %v969 = vld [vmem:[#allocation5 + $0x60] sm:$0xff]
        %v970 = vld [vmem:[#allocation5 + $0x68] sm:$0xff]
        %v971 = vld [vmem:[#allocation5 + $0x70] sm:$0xff]
        %v972 = vld [vmem:[#allocation5 + $0x78] sm:$0xff]
        %v973 = vld [vmem:[#allocation5 + $0x80] sm:$0xff]
        %v974 = vld [vmem:[#allocation5 + $0x88] sm:$0xff]
        %vm975 = vcmask 588800
        %v977 = vsel %vm975, %v971, 0
        %v980 = vsel %vm975, %v972, 0
        %v983 = vsel %vm975, %v973, 0
        %v986 = vsel %vm975, %v974, 0
        %988 = vmatprep.subr.mxu0 0.0
        %989 = vmatpush1.msra.mxu0 0.0
        %990 = vmatprep.subr.mxu0 0.0
        %991 = vmatpush1.msra.mxu0 0.0
        %992 = vmatprep.subr.mxu0 0.0
        %993 = vmatpush1.msra.mxu0 0.0
        %994 = vmatprep.subr.mxu0 0.0
        %995 = vmatpush1.msra.mxu0 0.0
        %996 = vmatprep.subr.mxu0 0.0
        %997 = vmatpush1.msra.mxu0 0.0
        %998 = vmatprep.subr.mxu0 0.0
        %999 = vmatpush1.msra.mxu0 0.0
        %1000 = vmatprep.subr.mxu0 0.0
        %1001 = vmatpush1.msra.mxu0 0.0
        %1002 = vmatprep.subr.mxu0 %v964
        %1003 = vmatpush1.msra.mxu0 %v963
        %1004 = vmatprep.subr.mxu0 %v960
        %1005 = vmatpush1.msra.mxu0 %v959
        %1006 = vmatprep.subr.mxu0 %v956
        %1007 = vmatpush1.msra.mxu0 %v955
        %1008 = vmatprep.subr.mxu0 %v952
        %1009 = vmatpush1.msra.mxu0 %v951
        %1010 = vmatprep.subr.mxu0 %v948
        %1011 = vmatpush1.msra.mxu0 %v947
        %1012 = vmatprep.subr.mxu0 %v944
        %1013 = vmatpush1.msra.mxu0 %v943
        %1014 = vmatprep.subr.mxu0 %v940
        %1015 = vmatpush1.msra.mxu0 %v939
        %1016 = vmatprep.subr.mxu0 %v936
        %1017 = vmatpush1.msra.mxu0 %v935
        %1018 = vmatprep.subr.mxu0 %v932
        %1019 = vmatpush1.msra.mxu0 %v931
        %1020 = vmatprep.subr.mxu0 0.0
        %1021 = vmatpush2.msra.mxu0 0.0
        %1022 = vmatprep.subr.mxu0 0.0
        %1023 = vmatpush2.msra.mxu0 0.0
        %1024 = vmatprep.subr.mxu0 0.0
        %1025 = vmatpush2.msra.mxu0 0.0
        %1026 = vmatprep.subr.mxu0 0.0
        %1027 = vmatpush2.msra.mxu0 0.0
        %1028 = vmatprep.subr.mxu0 0.0
        %1029 = vmatpush2.msra.mxu0 0.0
        %1030 = vmatprep.subr.mxu0 0.0
        %1031 = vmatpush2.msra.mxu0 0.0
        %1032 = vmatprep.subr.mxu0 0.0
        %1033 = vmatpush2.msra.mxu0 0.0
        %1034 = vmatprep.subr.mxu0 0.0
        %1035 = vmatpush2.msra.mxu0 0.0
        %1036 = vmatprep.subr.mxu0 0.0
        %1037 = vmatpush2.msra.mxu0 0.0
        %1038 = vmatprep.subr.mxu0 0.0
        %1039 = vmatpush2.msra.mxu0 0.0
        %1040 = vmatprep.subr.mxu0 0.0
        %1041 = vmatpush2.msra.mxu0 0.0
        %1042 = vmatprep.subr.mxu0 0.0
        %1043 = vmatpush2.msra.mxu0 0.0
        %1044 = vmatprep.subr.mxu0 0.0
        %1045 = vmatpush2.msra.mxu0 0.0
        %1046 = vmatprep.subr.mxu0 0.0
        %1047 = vmatpush2.msra.mxu0 0.0
        %1048 = vmatprep.subr.mxu0 0.0
        %1049 = vmatpush2.msra.mxu0 0.0
        %1050 = vmatprep.subr.mxu0 0.0
        %1051 = vmatpush2.msra.mxu0 0.0
        %1052 = vmatprep.mubr.f32.mxu0 0.0
        %1053 = vmatmul.mubr.f32.gmra.mxu0 %v977
        %v1054 = vpop.f32.mrf.mxu0
        %v1055 = vadd.f32 0.0, %v1054
        %v1056 = vpop.f32.mrf.mxu0
        %v1057 = vadd.f32 0.0, %v1056
        %1058 = vmatprep.mubr.f32.mxu0 0.0
        %1059 = vmatmul.mubr.f32.gmra.mxu0 %v980
        %v1060 = vpop.f32.mrf.mxu0
        %v1061 = vadd.f32 0.0, %v1060
        %v1062 = vpop.f32.mrf.mxu0
        %v1063 = vadd.f32 0.0, %v1062
        %1064 = vmatprep.mubr.f32.mxu0 0.0
        %1065 = vmatmul.mubr.f32.gmra.mxu0 %v983
        %v1066 = vpop.f32.mrf.mxu0
        %v1067 = vadd.f32 0.0, %v1066
        %v1068 = vpop.f32.mrf.mxu0
        %v1069 = vadd.f32 0.0, %v1068
        %1070 = vmatprep.mubr.f32.mxu0 0.0
        %1071 = vmatmul.mubr.f32.gmra.mxu0 %v986
        %v1072 = vpop.f32.mrf.mxu0
        %v1073 = vadd.f32 0.0, %v1072
        %v1074 = vpop.f32.mrf.mxu0
        %v1075 = vadd.f32 0.0, %v1074
        %1076 = vdwg.mxu0
        %1077 = vmatprep.subr.mxu0 0.0
        %1078 = vmatpush1.msra.mxu0 0.0
        %1079 = vmatprep.subr.mxu0 0.0
        %1080 = vmatpush1.msra.mxu0 0.0
        %1081 = vmatprep.subr.mxu0 0.0
        %1082 = vmatpush1.msra.mxu0 0.0
        %1083 = vmatprep.subr.mxu0 0.0
        %1084 = vmatpush1.msra.mxu0 0.0
        %1085 = vmatprep.subr.mxu0 0.0
        %1086 = vmatpush1.msra.mxu0 0.0
        %1087 = vmatprep.subr.mxu0 0.0
        %1088 = vmatpush1.msra.mxu0 0.0
        %1089 = vmatprep.subr.mxu0 0.0
        %1090 = vmatpush1.msra.mxu0 0.0
        %1091 = vmatprep.subr.mxu0 %v966
        %1092 = vmatpush1.msra.mxu0 %v965
        %1093 = vmatprep.subr.mxu0 %v962
        %1094 = vmatpush1.msra.mxu0 %v961
        %1095 = vmatprep.subr.mxu0 %v958
        %1096 = vmatpush1.msra.mxu0 %v957
        %1097 = vmatprep.subr.mxu0 %v954
        %1098 = vmatpush1.msra.mxu0 %v953
        %1099 = vmatprep.subr.mxu0 %v950
        %1100 = vmatpush1.msra.mxu0 %v949
        %1101 = vmatprep.subr.mxu0 %v946
        %1102 = vmatpush1.msra.mxu0 %v945
        %1103 = vmatprep.subr.mxu0 %v942
        %1104 = vmatpush1.msra.mxu0 %v941
        %1105 = vmatprep.subr.mxu0 %v938
        %1106 = vmatpush1.msra.mxu0 %v937
        %1107 = vmatprep.subr.mxu0 %v934
        %1108 = vmatpush1.msra.mxu0 %v933
        %1109 = vmatprep.subr.mxu0 0.0
        %1110 = vmatpush2.msra.mxu0 0.0
        %1111 = vmatprep.subr.mxu0 0.0
        %1112 = vmatpush2.msra.mxu0 0.0
        %1113 = vmatprep.subr.mxu0 0.0
        %1114 = vmatpush2.msra.mxu0 0.0
        %1115 = vmatprep.subr.mxu0 0.0
        %1116 = vmatpush2.msra.mxu0 0.0
        %1117 = vmatprep.subr.mxu0 0.0
        %1118 = vmatpush2.msra.mxu0 0.0
        %1119 = vmatprep.subr.mxu0 0.0
        %1120 = vmatpush2.msra.mxu0 0.0
        %1121 = vmatprep.subr.mxu0 0.0
        %1122 = vmatpush2.msra.mxu0 0.0
        %1123 = vmatprep.subr.mxu0 0.0
        %1124 = vmatpush2.msra.mxu0 0.0
        %1125 = vmatprep.subr.mxu0 0.0
        %1126 = vmatpush2.msra.mxu0 0.0
        %1127 = vmatprep.subr.mxu0 0.0
        %1128 = vmatpush2.msra.mxu0 0.0
        %1129 = vmatprep.subr.mxu0 0.0
        %1130 = vmatpush2.msra.mxu0 0.0
        %1131 = vmatprep.subr.mxu0 0.0
        %1132 = vmatpush2.msra.mxu0 0.0
        %1133 = vmatprep.subr.mxu0 0.0
        %1134 = vmatpush2.msra.mxu0 0.0
        %1135 = vmatprep.subr.mxu0 0.0
        %1136 = vmatpush2.msra.mxu0 0.0
        %1137 = vmatprep.subr.mxu0 0.0
        %1138 = vmatpush2.msra.mxu0 0.0
        %1139 = vmatprep.subr.mxu0 0.0
        %1140 = vmatpush2.msra.mxu0 0.0
        %1141 = vmatprep.mubr.f32.mxu0 0.0
        %1142 = vmatmul.mubr.f32.gmra.mxu0 %v977
        %v1143 = vpop.f32.mrf.mxu0
        %v1144 = vadd.f32 0.0, %v1143
        %v1145 = vpop.f32.mrf.mxu0
        %v1146 = vadd.f32 0.0, %v1145
        %1147 = vmatprep.mubr.f32.mxu0 0.0
        %1148 = vmatmul.mubr.f32.gmra.mxu0 %v980
        %v1149 = vpop.f32.mrf.mxu0
        %v1150 = vadd.f32 0.0, %v1149
        %v1151 = vpop.f32.mrf.mxu0
        %v1152 = vadd.f32 0.0, %v1151
        %1153 = vmatprep.mubr.f32.mxu0 0.0
        %1154 = vmatmul.mubr.f32.gmra.mxu0 %v983
        %v1155 = vpop.f32.mrf.mxu0
        %v1156 = vadd.f32 0.0, %v1155
        %v1157 = vpop.f32.mrf.mxu0
        %v1158 = vadd.f32 0.0, %v1157
        %1159 = vmatprep.mubr.f32.mxu0 0.0
        %1160 = vmatmul.mubr.f32.gmra.mxu0 %v986
        %v1161 = vpop.f32.mrf.mxu0
        %v1162 = vadd.f32 0.0, %v1161
        %v1163 = vpop.f32.mrf.mxu0
        %v1164 = vadd.f32 0.0, %v1163
        %1165 = vdwg.mxu0
        %v1167 = vsel %vm188, %v967, 0
        %v1170 = vsel %vm188, %v968, 0
        %v1173 = vsel %vm188, %v969, 0
        %v1176 = vsel %vm188, %v970, 0
        %1178 = vmatprep.subr.mxu0 0.0
        %1179 = vmatpush1.msra.mxu0 0.0
        %1180 = vmatprep.subr.mxu0 0.0
        %1181 = vmatpush1.msra.mxu0 0.0
        %1182 = vmatprep.subr.mxu0 0.0
        %1183 = vmatpush1.msra.mxu0 0.0
        %1184 = vmatprep.subr.mxu0 0.0
        %1185 = vmatpush1.msra.mxu0 0.0
        %1186 = vmatprep.subr.mxu0 0.0
        %1187 = vmatpush1.msra.mxu0 0.0
        %1188 = vmatprep.subr.mxu0 0.0
        %1189 = vmatpush1.msra.mxu0 0.0
        %1190 = vmatprep.subr.mxu0 0.0
        %1191 = vmatpush1.msra.mxu0 0.0
        %1192 = vmatprep.subr.mxu0 0.0
        %1193 = vmatpush1.msra.mxu0 0.0
        %1194 = vmatprep.subr.mxu0 0.0
        %1195 = vmatpush1.msra.mxu0 0.0
        %1196 = vmatprep.subr.mxu0 0.0
        %1197 = vmatpush1.msra.mxu0 0.0
        %1198 = vmatprep.subr.mxu0 0.0
        %1199 = vmatpush1.msra.mxu0 0.0
        %1200 = vmatprep.subr.mxu0 0.0
        %1201 = vmatpush1.msra.mxu0 0.0
        %1202 = vmatprep.subr.mxu0 0.0
        %1203 = vmatpush1.msra.mxu0 0.0
        %1204 = vmatprep.subr.mxu0 0.0
        %1205 = vmatpush1.msra.mxu0 0.0
        %1206 = vmatprep.subr.mxu0 0.0
        %1207 = vmatpush1.msra.mxu0 0.0
        %1208 = vmatprep.subr.mxu0 %v415
        %1209 = vmatpush1.msra.mxu0 %v412
        %1210 = vmatprep.subr.mxu0 0.0
        %1211 = vmatpush2.msra.mxu0 0.0
        %1212 = vmatprep.subr.mxu0 0.0
        %1213 = vmatpush2.msra.mxu0 0.0
        %1214 = vmatprep.subr.mxu0 0.0
        %1215 = vmatpush2.msra.mxu0 0.0
        %1216 = vmatprep.subr.mxu0 0.0
        %1217 = vmatpush2.msra.mxu0 0.0
        %1218 = vmatprep.subr.mxu0 0.0
        %1219 = vmatpush2.msra.mxu0 0.0
        %1220 = vmatprep.subr.mxu0 0.0
        %1221 = vmatpush2.msra.mxu0 0.0
        %1222 = vmatprep.subr.mxu0 0.0
        %1223 = vmatpush2.msra.mxu0 0.0
        %1224 = vmatprep.subr.mxu0 0.0
        %1225 = vmatpush2.msra.mxu0 0.0
        %1226 = vmatprep.subr.mxu0 0.0
        %1227 = vmatpush2.msra.mxu0 0.0
        %1228 = vmatprep.subr.mxu0 0.0
        %1229 = vmatpush2.msra.mxu0 0.0
        %1230 = vmatprep.subr.mxu0 0.0
        %1231 = vmatpush2.msra.mxu0 0.0
        %1232 = vmatprep.subr.mxu0 0.0
        %1233 = vmatpush2.msra.mxu0 0.0
        %1234 = vmatprep.subr.mxu0 0.0
        %1235 = vmatpush2.msra.mxu0 0.0
        %1236 = vmatprep.subr.mxu0 0.0
        %1237 = vmatpush2.msra.mxu0 0.0
        %1238 = vmatprep.subr.mxu0 0.0
        %1239 = vmatpush2.msra.mxu0 0.0
        %1240 = vmatprep.subr.mxu0 0.0
        %1241 = vmatpush2.msra.mxu0 0.0
        %1242 = vmatprep.mubr.f32.mxu0 0.0
        %1243 = vmatmul.mubr.f32.gmra.mxu0 %v1167
        %v1244 = vpop.f32.mrf.mxu0
        %v1245 = vadd.f32 %v1055, %v1244
        %v1246 = vpop.f32.mrf.mxu0
        %v1247 = vadd.f32 %v1057, %v1246
        %1248 = vmatprep.mubr.f32.mxu0 0.0
        %1249 = vmatmul.mubr.f32.gmra.mxu0 %v1170
        %v1250 = vpop.f32.mrf.mxu0
        %v1251 = vadd.f32 %v1061, %v1250
        %v1252 = vpop.f32.mrf.mxu0
        %v1253 = vadd.f32 %v1063, %v1252
        %1254 = vmatprep.mubr.f32.mxu0 0.0
        %1255 = vmatmul.mubr.f32.gmra.mxu0 %v1173
        %v1256 = vpop.f32.mrf.mxu0
        %v1257 = vadd.f32 %v1067, %v1256
        %v1258 = vpop.f32.mrf.mxu0
        %v1259 = vadd.f32 %v1069, %v1258
        %1260 = vmatprep.mubr.f32.mxu0 0.0
        %1261 = vmatmul.mubr.f32.gmra.mxu0 %v1176
        %v1262 = vpop.f32.mrf.mxu0
        %v1263 = vadd.f32 %v1073, %v1262
        %v1264 = vpop.f32.mrf.mxu0
        %v1265 = vadd.f32 %v1075, %v1264
        %1266 = vdwg.mxu0
        %1267 = vmatprep.subr.mxu0 0.0
        %1268 = vmatpush1.msra.mxu0 0.0
        %1269 = vmatprep.subr.mxu0 0.0
        %1270 = vmatpush1.msra.mxu0 0.0
        %1271 = vmatprep.subr.mxu0 0.0
        %1272 = vmatpush1.msra.mxu0 0.0
        %1273 = vmatprep.subr.mxu0 0.0
        %1274 = vmatpush1.msra.mxu0 0.0
        %1275 = vmatprep.subr.mxu0 0.0
        %1276 = vmatpush1.msra.mxu0 0.0
        %1277 = vmatprep.subr.mxu0 0.0
        %1278 = vmatpush1.msra.mxu0 0.0
        %1279 = vmatprep.subr.mxu0 0.0
        %1280 = vmatpush1.msra.mxu0 0.0
        %1281 = vmatprep.subr.mxu0 0.0
        %1282 = vmatpush1.msra.mxu0 0.0
        %1283 = vmatprep.subr.mxu0 0.0
        %1284 = vmatpush1.msra.mxu0 0.0
        %1285 = vmatprep.subr.mxu0 0.0
        %1286 = vmatpush1.msra.mxu0 0.0
        %1287 = vmatprep.subr.mxu0 0.0
        %1288 = vmatpush1.msra.mxu0 0.0
        %1289 = vmatprep.subr.mxu0 0.0
        %1290 = vmatpush1.msra.mxu0 0.0
        %1291 = vmatprep.subr.mxu0 0.0
        %1292 = vmatpush1.msra.mxu0 0.0
        %1293 = vmatprep.subr.mxu0 0.0
        %1294 = vmatpush1.msra.mxu0 0.0
        %1295 = vmatprep.subr.mxu0 0.0
        %1296 = vmatpush1.msra.mxu0 0.0
        %1297 = vmatprep.subr.mxu0 %v421
        %1298 = vmatpush1.msra.mxu0 %v418
        %1299 = vmatprep.subr.mxu0 0.0
        %1300 = vmatpush2.msra.mxu0 0.0
        %1301 = vmatprep.subr.mxu0 0.0
        %1302 = vmatpush2.msra.mxu0 0.0
        %1303 = vmatprep.subr.mxu0 0.0
        %1304 = vmatpush2.msra.mxu0 0.0
        %1305 = vmatprep.subr.mxu0 0.0
        %1306 = vmatpush2.msra.mxu0 0.0
        %1307 = vmatprep.subr.mxu0 0.0
        %1308 = vmatpush2.msra.mxu0 0.0
        %1309 = vmatprep.subr.mxu0 0.0
        %1310 = vmatpush2.msra.mxu0 0.0
        %1311 = vmatprep.subr.mxu0 0.0
        %1312 = vmatpush2.msra.mxu0 0.0
        %1313 = vmatprep.subr.mxu0 0.0
        %1314 = vmatpush2.msra.mxu0 0.0
        %1315 = vmatprep.subr.mxu0 0.0
        %1316 = vmatpush2.msra.mxu0 0.0
        %1317 = vmatprep.subr.mxu0 0.0
        %1318 = vmatpush2.msra.mxu0 0.0
        %1319 = vmatprep.subr.mxu0 0.0
        %1320 = vmatpush2.msra.mxu0 0.0
        %1321 = vmatprep.subr.mxu0 0.0
        %1322 = vmatpush2.msra.mxu0 0.0
        %1323 = vmatprep.subr.mxu0 0.0
        %1324 = vmatpush2.msra.mxu0 0.0
        %1325 = vmatprep.subr.mxu0 0.0
        %1326 = vmatpush2.msra.mxu0 0.0
        %1327 = vmatprep.subr.mxu0 0.0
        %1328 = vmatpush2.msra.mxu0 0.0
        %1329 = vmatprep.subr.mxu0 0.0
        %1330 = vmatpush2.msra.mxu0 0.0
        %1331 = vmatprep.mubr.f32.mxu0 0.0
        %1332 = vmatmul.mubr.f32.gmra.mxu0 %v1167
        %v1333 = vpop.f32.mrf.mxu0
        %v1334 = vadd.f32 %v1144, %v1333
        %v1335 = vpop.f32.mrf.mxu0
        %v1336 = vadd.f32 %v1146, %v1335
        %1337 = vmatprep.mubr.f32.mxu0 0.0
        %1338 = vmatmul.mubr.f32.gmra.mxu0 %v1170
        %v1339 = vpop.f32.mrf.mxu0
        %v1340 = vadd.f32 %v1150, %v1339
        %v1341 = vpop.f32.mrf.mxu0
        %v1342 = vadd.f32 %v1152, %v1341
        %1343 = vmatprep.mubr.f32.mxu0 0.0
        %1344 = vmatmul.mubr.f32.gmra.mxu0 %v1173
        %v1345 = vpop.f32.mrf.mxu0
        %v1346 = vadd.f32 %v1156, %v1345
        %v1347 = vpop.f32.mrf.mxu0
        %v1348 = vadd.f32 %v1158, %v1347
        %1349 = vmatprep.mubr.f32.mxu0 0.0
        %1350 = vmatmul.mubr.f32.gmra.mxu0 %v1176
        %v1351 = vpop.f32.mrf.mxu0
        %v1352 = vadd.f32 %v1162, %v1351
        %v1353 = vpop.f32.mrf.mxu0
        %v1354 = vadd.f32 %v1164, %v1353
        %1355 = vdwg.mxu0
        %v1356 = vld [vmem:[#allocation5 + $0x108] sm:$0xff]
        %v1357 = vld [vmem:[#allocation5 + $0x110] sm:$0xff]
        %v1358 = vld [vmem:[#allocation5 + $0x118] sm:$0xff]
        %v1359 = vld [vmem:[#allocation5 + $0x120] sm:$0xff]
        %1361 = vset.pattern.permute.xlu0 0
        %1362 = vperm.xlu0 %1361, %v1356
        %v1363 = vpop.permute.xlu0 %1362
        %1366 = vset.pattern.permute.xlu0 0
        %1367 = vperm.xlu0 %1366, %v1357
        %v1368 = vpop.permute.xlu0 %1367
        %1371 = vset.pattern.permute.xlu0 0
        %1372 = vperm.xlu0 %1371, %v1358
        %v1373 = vpop.permute.xlu0 %1372
        %1376 = vset.pattern.permute.xlu0 0
        %1377 = vperm.xlu0 %1376, %v1359
        %v1378 = vpop.permute.xlu0 %1377
        %v1380 = vadd.f32 %v1245, %v1363
        %v1381 = vadd.f32 %v1247, %v1363
        %v1382 = vadd.f32 %v1334, %v1363
        %v1383 = vadd.f32 %v1336, %v1363
        %v1384 = vadd.f32 %v1251, %v1368
        %v1385 = vadd.f32 %v1253, %v1368
        %v1386 = vadd.f32 %v1340, %v1368
        %v1387 = vadd.f32 %v1342, %v1368
        %v1388 = vadd.f32 %v1257, %v1373
        %v1389 = vadd.f32 %v1259, %v1373
        %v1390 = vadd.f32 %v1346, %v1373
        %v1391 = vadd.f32 %v1348, %v1373
        %v1392 = vadd.f32 %v1263, %v1378
        %v1393 = vadd.f32 %v1265, %v1378
        %v1394 = vadd.f32 %v1352, %v1378
        %v1395 = vadd.f32 %v1354, %v1378
        %vm1396 = vcmp.gt.f32.partialorder %v1380, 0.0
        %vm1397 = vcmp.gt.f32.partialorder %v1381, 0.0
        %vm1398 = vcmp.gt.f32.partialorder %v1382, 0.0
        %vm1399 = vcmp.gt.f32.partialorder %v1383, 0.0
        %vm1400 = vcmp.gt.f32.partialorder %v1384, 0.0
        %vm1401 = vcmp.gt.f32.partialorder %v1385, 0.0
        %vm1402 = vcmp.gt.f32.partialorder %v1386, 0.0
        %vm1403 = vcmp.gt.f32.partialorder %v1387, 0.0
        %vm1404 = vcmp.gt.f32.partialorder %v1388, 0.0
        %vm1405 = vcmp.gt.f32.partialorder %v1389, 0.0
        %vm1406 = vcmp.gt.f32.partialorder %v1390, 0.0
        %vm1407 = vcmp.gt.f32.partialorder %v1391, 0.0
        %vm1408 = vcmp.gt.f32.partialorder %v1392, 0.0
        %vm1409 = vcmp.gt.f32.partialorder %v1393, 0.0
        %vm1410 = vcmp.gt.f32.partialorder %v1394, 0.0
        %vm1411 = vcmp.gt.f32.partialorder %v1395, 0.0
        %v1412 = vmul.f32 %v1380, 0.1
        %v1413 = vmul.f32 %v1381, 0.1
        %v1414 = vmul.f32 %v1382, 0.1
        %v1415 = vmul.f32 %v1383, 0.1
        %v1416 = vmul.f32 %v1384, 0.1
        %v1417 = vmul.f32 %v1385, 0.1
        %v1418 = vmul.f32 %v1386, 0.1
        %v1419 = vmul.f32 %v1387, 0.1
        %v1420 = vmul.f32 %v1388, 0.1
        %v1421 = vmul.f32 %v1389, 0.1
        %v1422 = vmul.f32 %v1390, 0.1
        %v1423 = vmul.f32 %v1391, 0.1
        %v1424 = vmul.f32 %v1392, 0.1
        %v1425 = vmul.f32 %v1393, 0.1
        %v1426 = vmul.f32 %v1394, 0.1
        %v1427 = vmul.f32 %v1395, 0.1
        %v1428 = vsel %vm1396, %v1380, %v1412
        %v1429 = vsel %vm1397, %v1381, %v1413
        %v1430 = vsel %vm1398, %v1382, %v1414
        %v1431 = vsel %vm1399, %v1383, %v1415
        %v1432 = vsel %vm1400, %v1384, %v1416
        %v1433 = vsel %vm1401, %v1385, %v1417
        %v1434 = vsel %vm1402, %v1386, %v1418
        %v1435 = vsel %vm1403, %v1387, %v1419
        %v1436 = vsel %vm1404, %v1388, %v1420
        %v1437 = vsel %vm1405, %v1389, %v1421
        %v1438 = vsel %vm1406, %v1390, %v1422
        %v1439 = vsel %vm1407, %v1391, %v1423
        %v1440 = vsel %vm1408, %v1392, %v1424
        %v1441 = vsel %vm1409, %v1393, %v1425
        %v1442 = vsel %vm1410, %v1394, %v1426
        %v1443 = vsel %vm1411, %v1395, %v1427
        %v1444 = vld [vmem:[#allocation5 + $0x90] sm:$0xff]
        %v1445 = vld [vmem:[#allocation5 + $0x98] sm:$0xff]
        %v1446 = vld [vmem:[#allocation5 + $0xa0] sm:$0xff]
        %v1447 = vld [vmem:[#allocation5 + $0xa8] sm:$0xff]
        %v1448 = vld [vmem:[#allocation5 + $0x128] sm:$0xff]
        %v1449 = vld [vmem:[#allocation5 + $0x130] sm:$0xff]
        %v1450 = vld [vmem:[#allocation5 + $0x138] sm:$0xff]
        %v1451 = vld [vmem:[#allocation5 + $0x140] sm:$0xff]
        %1453 = vset.pattern.permute.xlu0 0
        %1454 = vperm.xlu0 %1453, %v1448
        %v1455 = vpop.permute.xlu0 %1454
        %1458 = vset.pattern.permute.xlu0 0
        %1459 = vperm.xlu0 %1458, %v1449
        %v1460 = vpop.permute.xlu0 %1459
        %1463 = vset.pattern.permute.xlu0 0
        %1464 = vperm.xlu0 %1463, %v1450
        %v1465 = vpop.permute.xlu0 %1464
        %1468 = vset.pattern.permute.xlu0 0
        %1469 = vperm.xlu0 %1468, %v1451
        %v1470 = vpop.permute.xlu0 %1469
        %vm1472 = vcmask 261120
        %v1474 = vsel %vm1472, %v1444, 0
        %v1477 = vsel %vm1472, %v1445, 0
        %v1480 = vsel %vm1472, %v1446, 0
        %v1483 = vsel %vm1472, %v1447, 0
        %1485 = vmatprep.subr.mxu0 0.0
        %1486 = vmatpush1.msra.mxu0 0.0
        %1487 = vmatprep.subr.mxu0 0.0
        %1488 = vmatpush1.msra.mxu0 0.0
        %1489 = vmatprep.subr.mxu0 0.0
        %1490 = vmatpush1.msra.mxu0 0.0
        %1491 = vmatprep.subr.mxu0 0.0
        %1492 = vmatpush1.msra.mxu0 0.0
        %1493 = vmatprep.subr.mxu0 0.0
        %1494 = vmatpush1.msra.mxu0 0.0
        %1495 = vmatprep.subr.mxu0 0.0
        %1496 = vmatpush1.msra.mxu0 0.0
        %1497 = vmatprep.subr.mxu0 0.0
        %1498 = vmatpush1.msra.mxu0 0.0
        %1499 = vmatprep.subr.mxu0 0.0
        %1500 = vmatpush1.msra.mxu0 0.0
        %1501 = vmatprep.subr.mxu0 0.0
        %1502 = vmatpush1.msra.mxu0 0.0
        %1503 = vmatprep.subr.mxu0 0.0
        %1504 = vmatpush1.msra.mxu0 0.0
        %1505 = vmatprep.subr.mxu0 0.0
        %1506 = vmatpush1.msra.mxu0 0.0
        %1507 = vmatprep.subr.mxu0 0.0
        %1508 = vmatpush1.msra.mxu0 0.0
        %1509 = vmatprep.subr.mxu0 %v1441
        %1510 = vmatpush1.msra.mxu0 %v1440
        %1511 = vmatprep.subr.mxu0 %v1437
        %1512 = vmatpush1.msra.mxu0 %v1436
        %1513 = vmatprep.subr.mxu0 %v1433
        %1514 = vmatpush1.msra.mxu0 %v1432
        %1515 = vmatprep.subr.mxu0 %v1429
        %1516 = vmatpush1.msra.mxu0 %v1428
        %1517 = vmatprep.subr.mxu0 0.0
        %1518 = vmatpush2.msra.mxu0 0.0
        %1519 = vmatprep.subr.mxu0 0.0
        %1520 = vmatpush2.msra.mxu0 0.0
        %1521 = vmatprep.subr.mxu0 0.0
        %1522 = vmatpush2.msra.mxu0 0.0
        %1523 = vmatprep.subr.mxu0 0.0
        %1524 = vmatpush2.msra.mxu0 0.0
        %1525 = vmatprep.subr.mxu0 0.0
        %1526 = vmatpush2.msra.mxu0 0.0
        %1527 = vmatprep.subr.mxu0 0.0
        %1528 = vmatpush2.msra.mxu0 0.0
        %1529 = vmatprep.subr.mxu0 0.0
        %1530 = vmatpush2.msra.mxu0 0.0
        %1531 = vmatprep.subr.mxu0 0.0
        %1532 = vmatpush2.msra.mxu0 0.0
        %1533 = vmatprep.subr.mxu0 0.0
        %1534 = vmatpush2.msra.mxu0 0.0
        %1535 = vmatprep.subr.mxu0 0.0
        %1536 = vmatpush2.msra.mxu0 0.0
        %1537 = vmatprep.subr.mxu0 0.0
        %1538 = vmatpush2.msra.mxu0 0.0
        %1539 = vmatprep.subr.mxu0 0.0
        %1540 = vmatpush2.msra.mxu0 0.0
        %1541 = vmatprep.subr.mxu0 0.0
        %1542 = vmatpush2.msra.mxu0 0.0
        %1543 = vmatprep.subr.mxu0 0.0
        %1544 = vmatpush2.msra.mxu0 0.0
        %1545 = vmatprep.subr.mxu0 0.0
        %1546 = vmatpush2.msra.mxu0 0.0
        %1547 = vmatprep.subr.mxu0 0.0
        %1548 = vmatpush2.msra.mxu0 0.0
        %1549 = vmatprep.mubr.f32.mxu0 0.0
        %1550 = vmatmul.mubr.f32.gmra.mxu0 %v1474
        %v1551 = vpop.f32.mrf.mxu0
        %v1552 = vadd.f32 %v1455, %v1551
        %v1553 = vpop.f32.mrf.mxu0
        %v1554 = vadd.f32 %v1455, %v1553
        %1555 = vmatprep.mubr.f32.mxu0 0.0
        %1556 = vmatmul.mubr.f32.gmra.mxu0 %v1477
        %v1557 = vpop.f32.mrf.mxu0
        %v1558 = vadd.f32 %v1460, %v1557
        %v1559 = vpop.f32.mrf.mxu0
        %v1560 = vadd.f32 %v1460, %v1559
        %1561 = vmatprep.mubr.f32.mxu0 0.0
        %1562 = vmatmul.mubr.f32.gmra.mxu0 %v1480
        %v1563 = vpop.f32.mrf.mxu0
        %v1564 = vadd.f32 %v1465, %v1563
        %v1565 = vpop.f32.mrf.mxu0
        %v1566 = vadd.f32 %v1465, %v1565
        %1567 = vmatprep.mubr.f32.mxu0 0.0
        %1568 = vmatmul.mubr.f32.gmra.mxu0 %v1483
        %v1569 = vpop.f32.mrf.mxu0
        %v1570 = vadd.f32 %v1470, %v1569
        %v1571 = vpop.f32.mrf.mxu0
        %v1572 = vadd.f32 %v1470, %v1571
        %1573 = vdwg.mxu0
        %1574 = vmatprep.subr.mxu0 0.0
        %1575 = vmatpush1.msra.mxu0 0.0
        %1576 = vmatprep.subr.mxu0 0.0
        %1577 = vmatpush1.msra.mxu0 0.0
        %1578 = vmatprep.subr.mxu0 0.0
        %1579 = vmatpush1.msra.mxu0 0.0
        %1580 = vmatprep.subr.mxu0 0.0
        %1581 = vmatpush1.msra.mxu0 0.0
        %1582 = vmatprep.subr.mxu0 0.0
        %1583 = vmatpush1.msra.mxu0 0.0
        %1584 = vmatprep.subr.mxu0 0.0
        %1585 = vmatpush1.msra.mxu0 0.0
        %1586 = vmatprep.subr.mxu0 0.0
        %1587 = vmatpush1.msra.mxu0 0.0
        %1588 = vmatprep.subr.mxu0 0.0
        %1589 = vmatpush1.msra.mxu0 0.0
        %1590 = vmatprep.subr.mxu0 0.0
        %1591 = vmatpush1.msra.mxu0 0.0
        %1592 = vmatprep.subr.mxu0 0.0
        %1593 = vmatpush1.msra.mxu0 0.0
        %1594 = vmatprep.subr.mxu0 0.0
        %1595 = vmatpush1.msra.mxu0 0.0
        %1596 = vmatprep.subr.mxu0 0.0
        %1597 = vmatpush1.msra.mxu0 0.0
        %1598 = vmatprep.subr.mxu0 %v1443
        %1599 = vmatpush1.msra.mxu0 %v1442
        %1600 = vmatprep.subr.mxu0 %v1439
        %1601 = vmatpush1.msra.mxu0 %v1438
        %1602 = vmatprep.subr.mxu0 %v1435
        %1603 = vmatpush1.msra.mxu0 %v1434
        %1604 = vmatprep.subr.mxu0 %v1431
        %1605 = vmatpush1.msra.mxu0 %v1430
        %1606 = vmatprep.subr.mxu0 0.0
        %1607 = vmatpush2.msra.mxu0 0.0
        %1608 = vmatprep.subr.mxu0 0.0
        %1609 = vmatpush2.msra.mxu0 0.0
        %1610 = vmatprep.subr.mxu0 0.0
        %1611 = vmatpush2.msra.mxu0 0.0
        %1612 = vmatprep.subr.mxu0 0.0
        %1613 = vmatpush2.msra.mxu0 0.0
        %1614 = vmatprep.subr.mxu0 0.0
        %1615 = vmatpush2.msra.mxu0 0.0
        %1616 = vmatprep.subr.mxu0 0.0
        %1617 = vmatpush2.msra.mxu0 0.0
        %1618 = vmatprep.subr.mxu0 0.0
        %1619 = vmatpush2.msra.mxu0 0.0
        %1620 = vmatprep.subr.mxu0 0.0
        %1621 = vmatpush2.msra.mxu0 0.0
        %1622 = vmatprep.subr.mxu0 0.0
        %1623 = vmatpush2.msra.mxu0 0.0
        %1624 = vmatprep.subr.mxu0 0.0
        %1625 = vmatpush2.msra.mxu0 0.0
        %1626 = vmatprep.subr.mxu0 0.0
        %1627 = vmatpush2.msra.mxu0 0.0
        %1628 = vmatprep.subr.mxu0 0.0
        %1629 = vmatpush2.msra.mxu0 0.0
        %1630 = vmatprep.subr.mxu0 0.0
        %1631 = vmatpush2.msra.mxu0 0.0
        %1632 = vmatprep.subr.mxu0 0.0
        %1633 = vmatpush2.msra.mxu0 0.0
        %1634 = vmatprep.subr.mxu0 0.0
        %1635 = vmatpush2.msra.mxu0 0.0
        %1636 = vmatprep.subr.mxu0 0.0
        %1637 = vmatpush2.msra.mxu0 0.0
        %1638 = vmatprep.mubr.f32.mxu0 0.0
        %1639 = vmatmul.mubr.f32.gmra.mxu0 %v1474
        %v1640 = vpop.f32.mrf.mxu0
        %v1641 = vadd.f32 %v1455, %v1640
        %v1642 = vpop.f32.mrf.mxu0
        %v1643 = vadd.f32 %v1455, %v1642
        %1644 = vmatprep.mubr.f32.mxu0 0.0
        %1645 = vmatmul.mubr.f32.gmra.mxu0 %v1477
        %v1646 = vpop.f32.mrf.mxu0
        %v1647 = vadd.f32 %v1460, %v1646
        %v1648 = vpop.f32.mrf.mxu0
        %v1649 = vadd.f32 %v1460, %v1648
        %1650 = vmatprep.mubr.f32.mxu0 0.0
        %1651 = vmatmul.mubr.f32.gmra.mxu0 %v1480
        %v1652 = vpop.f32.mrf.mxu0
        %v1653 = vadd.f32 %v1465, %v1652
        %v1654 = vpop.f32.mrf.mxu0
        %v1655 = vadd.f32 %v1465, %v1654
        %1656 = vmatprep.mubr.f32.mxu0 0.0
        %1657 = vmatmul.mubr.f32.gmra.mxu0 %v1483
        %v1658 = vpop.f32.mrf.mxu0
        %v1659 = vadd.f32 %v1470, %v1658
        %v1660 = vpop.f32.mrf.mxu0
        %v1661 = vadd.f32 %v1470, %v1660
        %1662 = vdwg.mxu0
        %vm1663 = vcmp.gt.f32.partialorder %v1552, 0.0
        %vm1664 = vcmp.gt.f32.partialorder %v1554, 0.0
        %vm1665 = vcmp.gt.f32.partialorder %v1641, 0.0
        %vm1666 = vcmp.gt.f32.partialorder %v1643, 0.0
        %vm1667 = vcmp.gt.f32.partialorder %v1558, 0.0
        %vm1668 = vcmp.gt.f32.partialorder %v1560, 0.0
        %vm1669 = vcmp.gt.f32.partialorder %v1647, 0.0
        %vm1670 = vcmp.gt.f32.partialorder %v1649, 0.0
        %vm1671 = vcmp.gt.f32.partialorder %v1564, 0.0
        %vm1672 = vcmp.gt.f32.partialorder %v1566, 0.0
        %vm1673 = vcmp.gt.f32.partialorder %v1653, 0.0
        %vm1674 = vcmp.gt.f32.partialorder %v1655, 0.0
        %vm1675 = vcmp.gt.f32.partialorder %v1570, 0.0
        %vm1676 = vcmp.gt.f32.partialorder %v1572, 0.0
        %vm1677 = vcmp.gt.f32.partialorder %v1659, 0.0
        %vm1678 = vcmp.gt.f32.partialorder %v1661, 0.0
        %v1679 = vmul.f32 %v1552, 0.1
        %v1680 = vmul.f32 %v1554, 0.1
        %v1681 = vmul.f32 %v1641, 0.1
        %v1682 = vmul.f32 %v1643, 0.1
        %v1683 = vmul.f32 %v1558, 0.1
        %v1684 = vmul.f32 %v1560, 0.1
        %v1685 = vmul.f32 %v1647, 0.1
        %v1686 = vmul.f32 %v1649, 0.1
        %v1687 = vmul.f32 %v1564, 0.1
        %v1688 = vmul.f32 %v1566, 0.1
        %v1689 = vmul.f32 %v1653, 0.1
        %v1690 = vmul.f32 %v1655, 0.1
        %v1691 = vmul.f32 %v1570, 0.1
        %v1692 = vmul.f32 %v1572, 0.1
        %v1693 = vmul.f32 %v1659, 0.1
        %v1694 = vmul.f32 %v1661, 0.1
        %v1695 = vsel %vm1663, %v1552, %v1679
        %v1696 = vsel %vm1664, %v1554, %v1680
        %v1697 = vsel %vm1665, %v1641, %v1681
        %v1698 = vsel %vm1666, %v1643, %v1682
        %v1699 = vsel %vm1667, %v1558, %v1683
        %v1700 = vsel %vm1668, %v1560, %v1684
        %v1701 = vsel %vm1669, %v1647, %v1685
        %v1702 = vsel %vm1670, %v1649, %v1686
        %v1703 = vsel %vm1671, %v1564, %v1687
        %v1704 = vsel %vm1672, %v1566, %v1688
        %v1705 = vsel %vm1673, %v1653, %v1689
        %v1706 = vsel %vm1674, %v1655, %v1690
        %v1707 = vsel %vm1675, %v1570, %v1691
        %v1708 = vsel %vm1676, %v1572, %v1692
        %v1709 = vsel %vm1677, %v1659, %v1693
        %v1710 = vsel %vm1678, %v1661, %v1694
        %v1711 = vld [vmem:[#allocation5 + $0xb0] sm:$0x1]
        %v1712 = vld [vmem:[#allocation5 + $0x148] sm:$0x1]
        %1714 = vset.pattern.permute.xlu0 0
        %1715 = vperm.xlu0 %1714, %v1712
        %v1716 = vpop.permute.xlu0 %1715
        %vm1718 = vcmask 523264
        %v1720 = vsel %vm1718, %v1711, 0
        %1722 = vmatprep.subr.mxu0 0.0
        %1723 = vmatpush1.msra.mxu0 0.0
        %1724 = vmatprep.subr.mxu0 0.0
        %1725 = vmatpush1.msra.mxu0 0.0
        %1726 = vmatprep.subr.mxu0 0.0
        %1727 = vmatpush1.msra.mxu0 0.0
        %1728 = vmatprep.subr.mxu0 0.0
        %1729 = vmatpush1.msra.mxu0 0.0
        %1730 = vmatprep.subr.mxu0 0.0
        %1731 = vmatpush1.msra.mxu0 0.0
        %1732 = vmatprep.subr.mxu0 0.0
        %1733 = vmatpush1.msra.mxu0 0.0
        %1734 = vmatprep.subr.mxu0 0.0
        %1735 = vmatpush1.msra.mxu0 0.0
        %1736 = vmatprep.subr.mxu0 0.0
        %1737 = vmatpush1.msra.mxu0 0.0
        %1738 = vmatprep.subr.mxu0 %v1708
        %1739 = vmatpush1.msra.mxu0 %v1707
        %1740 = vmatprep.subr.mxu0 %v1704
        %1741 = vmatpush1.msra.mxu0 %v1703
        %1742 = vmatprep.subr.mxu0 %v1700
        %1743 = vmatpush1.msra.mxu0 %v1699
        %1744 = vmatprep.subr.mxu0 %v1696
        %1745 = vmatpush1.msra.mxu0 %v1695
        %1746 = vmatprep.subr.mxu0 %v1441
        %1747 = vmatpush1.msra.mxu0 %v1440
        %1748 = vmatprep.subr.mxu0 %v1437
        %1749 = vmatpush1.msra.mxu0 %v1436
        %1750 = vmatprep.subr.mxu0 %v1433
        %1751 = vmatpush1.msra.mxu0 %v1432
        %1752 = vmatprep.subr.mxu0 %v1429
        %1753 = vmatpush1.msra.mxu0 %v1428
        %1754 = vmatprep.subr.mxu0 0.0
        %1755 = vmatpush2.msra.mxu0 0.0
        %1756 = vmatprep.subr.mxu0 0.0
        %1757 = vmatpush2.msra.mxu0 0.0
        %1758 = vmatprep.subr.mxu0 0.0
        %1759 = vmatpush2.msra.mxu0 0.0
        %1760 = vmatprep.subr.mxu0 0.0
        %1761 = vmatpush2.msra.mxu0 0.0
        %1762 = vmatprep.subr.mxu0 0.0
        %1763 = vmatpush2.msra.mxu0 0.0
        %1764 = vmatprep.subr.mxu0 0.0
        %1765 = vmatpush2.msra.mxu0 0.0
        %1766 = vmatprep.subr.mxu0 0.0
        %1767 = vmatpush2.msra.mxu0 0.0
        %1768 = vmatprep.subr.mxu0 0.0
        %1769 = vmatpush2.msra.mxu0 0.0
        %1770 = vmatprep.subr.mxu0 0.0
        %1771 = vmatpush2.msra.mxu0 0.0
        %1772 = vmatprep.subr.mxu0 0.0
        %1773 = vmatpush2.msra.mxu0 0.0
        %1774 = vmatprep.subr.mxu0 0.0
        %1775 = vmatpush2.msra.mxu0 0.0
        %1776 = vmatprep.subr.mxu0 0.0
        %1777 = vmatpush2.msra.mxu0 0.0
        %1778 = vmatprep.subr.mxu0 0.0
        %1779 = vmatpush2.msra.mxu0 0.0
        %1780 = vmatprep.subr.mxu0 0.0
        %1781 = vmatpush2.msra.mxu0 0.0
        %1782 = vmatprep.subr.mxu0 0.0
        %1783 = vmatpush2.msra.mxu0 0.0
        %1784 = vmatprep.subr.mxu0 0.0
        %1785 = vmatpush2.msra.mxu0 0.0
        %1786 = vmatprep.mubr.f32.mxu0 0.0
        %1787 = vmatmul.mubr.f32.gmra.mxu0 %v1720
        %v1788 = vpop.f32.mrf.mxu0
        %v1789 = vadd.f32 %v1716, %v1788
        %v1790 = vpop.f32.mrf.mxu0
        %v1791 = vadd.f32 %v1716, %v1790
        %1792 = vdwg.mxu0
        %1793 = vmatprep.subr.mxu0 0.0
        %1794 = vmatpush1.msra.mxu0 0.0
        %1795 = vmatprep.subr.mxu0 0.0
        %1796 = vmatpush1.msra.mxu0 0.0
        %1797 = vmatprep.subr.mxu0 0.0
        %1798 = vmatpush1.msra.mxu0 0.0
        %1799 = vmatprep.subr.mxu0 0.0
        %1800 = vmatpush1.msra.mxu0 0.0
        %1801 = vmatprep.subr.mxu0 0.0
        %1802 = vmatpush1.msra.mxu0 0.0
        %1803 = vmatprep.subr.mxu0 0.0
        %1804 = vmatpush1.msra.mxu0 0.0
        %1805 = vmatprep.subr.mxu0 0.0
        %1806 = vmatpush1.msra.mxu0 0.0
        %1807 = vmatprep.subr.mxu0 0.0
        %1808 = vmatpush1.msra.mxu0 0.0
        %1809 = vmatprep.subr.mxu0 %v1710
        %1810 = vmatpush1.msra.mxu0 %v1709
        %1811 = vmatprep.subr.mxu0 %v1706
        %1812 = vmatpush1.msra.mxu0 %v1705
        %1813 = vmatprep.subr.mxu0 %v1702
        %1814 = vmatpush1.msra.mxu0 %v1701
        %1815 = vmatprep.subr.mxu0 %v1698
        %1816 = vmatpush1.msra.mxu0 %v1697
        %1817 = vmatprep.subr.mxu0 %v1443
        %1818 = vmatpush1.msra.mxu0 %v1442
        %1819 = vmatprep.subr.mxu0 %v1439
        %1820 = vmatpush1.msra.mxu0 %v1438
        %1821 = vmatprep.subr.mxu0 %v1435
        %1822 = vmatpush1.msra.mxu0 %v1434
        %1823 = vmatprep.subr.mxu0 %v1431
        %1824 = vmatpush1.msra.mxu0 %v1430
        %1825 = vmatprep.subr.mxu0 0.0
        %1826 = vmatpush2.msra.mxu0 0.0
        %1827 = vmatprep.subr.mxu0 0.0
        %1828 = vmatpush2.msra.mxu0 0.0
        %1829 = vmatprep.subr.mxu0 0.0
        %1830 = vmatpush2.msra.mxu0 0.0
        %1831 = vmatprep.subr.mxu0 0.0
        %1832 = vmatpush2.msra.mxu0 0.0
        %1833 = vmatprep.subr.mxu0 0.0
        %1834 = vmatpush2.msra.mxu0 0.0
        %1835 = vmatprep.subr.mxu0 0.0
        %1836 = vmatpush2.msra.mxu0 0.0
        %1837 = vmatprep.subr.mxu0 0.0
        %1838 = vmatpush2.msra.mxu0 0.0
        %1839 = vmatprep.subr.mxu0 0.0
        %1840 = vmatpush2.msra.mxu0 0.0
        %1841 = vmatprep.subr.mxu0 0.0
        %1842 = vmatpush2.msra.mxu0 0.0
        %1843 = vmatprep.subr.mxu0 0.0
        %1844 = vmatpush2.msra.mxu0 0.0
        %1845 = vmatprep.subr.mxu0 0.0
        %1846 = vmatpush2.msra.mxu0 0.0
        %1847 = vmatprep.subr.mxu0 0.0
        %1848 = vmatpush2.msra.mxu0 0.0
        %1849 = vmatprep.subr.mxu0 0.0
        %1850 = vmatpush2.msra.mxu0 0.0
        %1851 = vmatprep.subr.mxu0 0.0
        %1852 = vmatpush2.msra.mxu0 0.0
        %1853 = vmatprep.subr.mxu0 0.0
        %1854 = vmatpush2.msra.mxu0 0.0
        %1855 = vmatprep.subr.mxu0 0.0
        %1856 = vmatpush2.msra.mxu0 0.0
        %1857 = vmatprep.mubr.f32.mxu0 0.0
        %1858 = vmatmul.mubr.f32.gmra.mxu0 %v1720
        %v1859 = vpop.f32.mrf.mxu0
        %v1860 = vadd.f32 %v1716, %v1859
        %v1861 = vpop.f32.mrf.mxu0
        %v1862 = vadd.f32 %v1716, %v1861
        %1863 = vdwg.mxu0
        %v1864 = vmax.f32 %v1789, 0.0
        %v1865 = vmax.f32 %v1791, 0.0
        %v1866 = vmax.f32 %v1860, 0.0
        %v1867 = vmax.f32 %v1862, 0.0
        %v1872 = vcombine.low %v1864, %v1865
        %v1873 = vcombine.low %v1866, %v1867
        %v1875 = vunpack.c.l.s4 1966171168
        %v1876 = vunpack.c.0.s8 %v1875
        %v1877 = vlaneseq
        %v1878 = vshrl.u32 %v1877, 7
        %v1879 = vsub.s32 %v1876, %v1878
        %v1880 = vrot.slane %v1872, %v1879
        %v1882 = vunpack.c.l.s4 1966171168
        %v1883 = vunpack.c.0.s8 %v1882
        %v1884 = vlaneseq
        %v1885 = vshrl.u32 %v1884, 7
        %v1886 = vsub.s32 %v1883, %v1885
        %v1887 = vrot.slane %v1873, %v1886
        %v1888 = vcombine.low %v1880, %v1887
        %v1890 = vunpack.c.l.s4 1966171168
        %v1891 = vunpack.c.0.s8 %v1890
        %v1892 = vlaneseq
        %v1893 = vshrl.u32 %v1892, 7
        %v1894 = vsub.s32 %v1891, %v1893
        %v1895 = vrot.slane %v1888, %v1894
        %v1897 = vlaneseq
        %vm1898 = vcmp.ge.s32.totalorder %v1897, 0
        %vm1899 = vcmp.lt.s32.totalorder %v1897, 512
        %vm1900 = vmand %vm1898, %vm1899
        %1901 = vst.msk [vmem:[%s174] sm:$0xf] %vm1900, %v1895
        %s1902 = sand.u32 %s75, 1
        %s1903 = scalar_lea.sflag [#allocation4], %s1902
        %s1904 = sand.u32 %s75, 1
        %s1905 = smul.addr %s1904, 4
        %s1906 = scalar_lea.vmem [#allocation7], %s1905
        // Predicated region
        $region37: #{ms_pinn_forward.1} parent=27 // pred_check
          %p1907 = pneg %p85
        $region38: #{ms_pinn_forward.1} parent=27 // pred_check_branch
          %1909 = sbr.rel (%p1907) target = $region40
        $region39: #{ms_pinn_forward.1} parent=27 // pred_region
          %s1910 = smul.u32 4, %s20
          %s1912 = ssub.s32 64, 64
          %1913 = vsyncadd %s1903, %s1912
          %s1914 = smul.addr %s1910, 16
          %s1915 = scalar_lea.hbm %s2, %s1914
          %s1917 = sshll.u32 %s1906, 4
          %s1918 = int_to_ptr.vmem [resolvable:$true] %s1917
          %1920 = dma.vmem_to_hbm [thread:$0]  %s1918, 64, %s1915, %s1903
        $region40: #{ms_pinn_forward.1} parent=27 // pred_fallthru
          _
      $region28: #{ms_pinn_forward.1} parent=5 // pred_fallthru
        _
      %p1921 = scmp.le.s32.totalorder 2, %s15
      // Predicated region
      $region41: #{ms_pinn_forward.1} parent=5 // pred_check
        %p1922 = pneg %p1921
      $region42: #{ms_pinn_forward.1} parent=5 // pred_check_branch
        %1924 = sbr.rel (%p1922) target = $region44
      $region43: #{ms_pinn_forward.1} parent=5 // pred_region
        %s1925 = ssub.s32 %s15, 2
        // Predicated region
        $region45: #{ms_pinn_forward.1} parent=43 // pred_check
          %p1926 = pneg %p91
        $region46: #{ms_pinn_forward.1} parent=43 // pred_check_branch
          %1928 = sbr.rel (%p1926) target = $region48
        $region47: #{ms_pinn_forward.1} parent=43 // pred_region
          %s1929 = sand.u32 %s76, 1
          %s1930 = scalar_lea.sflag [#allocation4], %s1929
          %s1931 = sand.u32 %s76, 1
          %s1932 = smul.addr %s1931, 4
          %s1933 = scalar_lea.vmem [#allocation7], %s1932
          %1934 = dma.done %s1930, 64
        $region48: #{ms_pinn_forward.1} parent=43 // pred_fallthru
          _
      $region44: #{ms_pinn_forward.1} parent=5 // pred_fallthru
        _
    $region6: #{ms_pinn_forward.1} parent=1 // loop_footer
      %s19 = sadd.s32 1, %s15
    $region7: #{ms_pinn_forward.1} parent=1 // loop_footer_branch
      %14 = sbr.rel target = $region3
    $region8: #{ms_pinn_forward.1} parent=1 // loop_exit
      _
    %1935 = vsyncpa [#allocation3], 1
    %s1936 = scalar_lea.sflag [#allocation3], 1
    %1937 = vsyncpa %s1936, 1
    %1938 = vsyncpa [#allocation6], 1
    %1939 = vsyncpa [#allocation4], 1
    %s1940 = scalar_lea.sflag [#allocation4], 1
    %1941 = vsyncpa %s1940, 1

</llo_original>
